<compile_context>
chip_gen: v7x
topology: tpu7x:2x2x1
jax: 0.10.0
libtpu: 0.0.40
codegen_flags: <defaults>
</compile_context>

<pallas_src>
import functools

import jax
import jax.numpy as jnp
from jax.experimental import pallas as pl
from jax.experimental.pallas import tpu as pltpu


# ---------------------------------------------------------------------------
# Fused RK4 CNF kernel
# ---------------------------------------------------------------------------
def cnf_rk4_kernel(z0_ref, ctx0_ref, wctx_ref, bctx_ref, *refs,
                   dims, gate_offs, hb_offs, n_steps, dt, tile_n):
    """Integrates dz/dt = MLP(ctx, z) and d(dlogp)/dt = -trace(dMLP/dz), t in [0,1].

    Ref order:
      z0   (TN, D)      initial state rows
      ctx0 (TN, C)      static context [pos, 0, cond]  (time column is zero)
      Wctx (C, G)       packed hyper_gate/hyper_bias weights (128-lane segments)
      bctx (1, G)       gate biases in gate segments, zeros in hb segments
      then per layer l: W_l (Din_l, Dout_l), b_l (1, Dout_l)
      outputs:          z_out (TN, D), dlp_out (TN, 1)
    """
    n_layers = len(dims) - 1
    D = dims[0]
    TN = tile_n

    w_refs = [refs[2 * l] for l in range(n_layers)]
    b_refs = [refs[2 * l + 1] for l in range(n_layers)]
    zout_ref = refs[2 * n_layers]
    dlp_ref = refs[2 * n_layers + 1]

    z0 = z0_ref[...].astype(jnp.float32)                        # (TN, D)
    ctx0 = ctx0_ref[...].astype(jnp.float32)                    # (TN, C)
    Wctx = wctx_ref[...]                                        # (C, G)
    bctx = bctx_ref[...]                                        # (1, G)

    # gate/hb depend only on ctx; ctx differs across stages only in its scalar
    # time column, so the context matmul is done ONCE per tile and the time
    # contribution is a rank-1 update per distinct stage time.
    proj0 = jnp.dot(ctx0, Wctx, preferred_element_type=jnp.float32) + bctx  # (TN, G)
    w_t = jnp.broadcast_to(Wctx[1:2, :], proj0.shape)            # hoisted broadcast

    Ws = [w_refs[l][...] for l in range(n_layers)]               # f32 weights
    bs = [b_refs[l][...] for l in range(n_layers)]
    Ws_bf = [w.astype(jnp.bfloat16) for w in Ws]                 # MXU operands

    # After layer 0, J = identity @ W0 * scale, i.e. W0 replicated over rows:
    # no identity input and no first-layer Jacobian matmul needed.
    W0_big = jnp.broadcast_to(Ws[0][:, None, :], (D, TN, dims[1]))

    # Diagonal mask for the exact trace (replaces D single-lane slices).
    kk = jax.lax.broadcasted_iota(jnp.int32, (D, TN, D), 0)
    jj = jax.lax.broadcasted_iota(jnp.int32, (D, TN, D), 2)
    diag = (kk == jj).astype(jnp.float32)

    def ctx_factors(t):
        """Per-layer (gate, hyper_bias) factors at time t — independent of z."""
        proj = proj0 + t * w_t
        gates, hbs = [], []
        for l in range(n_layers):
            dout = dims[l + 1]
            g0, b0 = gate_offs[l], hb_offs[l]
            # sigmoid via EUP exp + approx reciprocal (keeps the divide off VALU)
            gate = pl.reciprocal(1.0 + jnp.exp(-proj[:, g0:g0 + dout]),
                                 approx=True)                    # (TN, dout)
            gates.append(gate)
            hbs.append(proj[:, b0:b0 + dout])                    # (TN, dout)
        return gates, hbs

    def vector_field(gates, hbs, h_in):
        """Returns (z_dot (TN, D), exact Jacobian trace (TN, 1))."""
        h = h_in
        J = None                                                 # (D, TN, Dout_l)
        for l in range(n_layers):
            dout = dims[l + 1]
            gate = gates[l]
            pre = jnp.dot(h.astype(jnp.bfloat16), Ws_bf[l],
                          preferred_element_type=jnp.float32) + bs[l]
            out = pre * gate + hbs[l]
            if l < n_layers - 1:
                act = jnp.tanh(out)
                scale = gate * (1.0 - act * act)                 # gate * tanh'
                h = act
            else:
                scale = gate
                h = out
            if l == 0:
                J = W0_big * scale[None, :, :]
            else:
                Jm = jnp.dot(J.reshape(D * TN, dims[l]).astype(jnp.bfloat16),
                             Ws_bf[l], preferred_element_type=jnp.float32)
                J = Jm.reshape(D, TN, dout) * scale[None, :, :]
        # trace[n] = sum_k J[k, n, k]
        tr = (J * diag).sum(axis=0).sum(axis=-1, keepdims=True)  # (TN, 1)
        return h, tr

    def rk4_step(i, carry):
        zc, dlp = carry
        t = i.astype(jnp.float32) * dt
        # Stage-time factors: stages 2 and 3 share t + dt/2, so compute 3 sets.
        fac_0 = ctx_factors(t)
        fac_h = ctx_factors(t + 0.5 * dt)
        fac_1 = ctx_factors(t + dt)
        k1z, k1t = vector_field(*fac_0, zc)
        k2z, k2t = vector_field(*fac_h, zc + (0.5 * dt) * k1z)
        k3z, k3t = vector_field(*fac_h, zc + (0.5 * dt) * k2z)
        k4z, k4t = vector_field(*fac_1, zc + dt * k3z)
        zc = zc + (dt / 6.0) * (k1z + 2.0 * k2z + 2.0 * k3z + k4z)
        # d(delta_logpz)/dt = -trace
        dlp = dlp - (dt / 6.0) * (k1t + 2.0 * k2t + 2.0 * k3t + k4t)
        return zc, dlp

    z_f, dlp_f = jax.lax.fori_loop(
        0, n_steps, rk4_step, (z0, jnp.zeros((TN, 1), jnp.float32)))

    # Stores happen once per tile (not per stage), so the narrow dlp lane width
    # is not in the hot path.
    zout_ref[...] = z_f
    dlp_ref[...] = dlp_f


# ---------------------------------------------------------------------------
# Wrapper: weight packing, tiling, pallas_call
# ---------------------------------------------------------------------------
def cnf_rk4_pallas(z_flat, ctx_static, flat_params, n_steps=8, tile_n=256):
    """Runs the fused RK4 integration. Returns (z_final (N,D), dlp_integral (N,1))."""
    N, D = z_flat.shape
    C = ctx_static.shape[1]
    n_layers = len(flat_params) // 5
    dims = [D] + [flat_params[5 * l].shape[1] for l in range(n_layers)]
    assert dims[-1] == D

    # Pack all hyper_gate / hyper_bias weights into one (C, G) matrix so the
    # context projection is a single wide matmul; each layer segment is padded
    # to a multiple of 128 lanes so per-layer slices are lane-tile aligned.
    w_cols, b_cols, gate_offs, hb_offs = [], [], [], []
    off = 0
    for l in range(n_layers):
        dout = dims[l + 1]
        seg = ((dout + 127) // 128) * 128
        _, _, Wg, bg, Wb = flat_params[5 * l:5 * (l + 1)]
        gate_offs.append(off)
        w_cols.append(jnp.pad(Wg, ((0, 0), (0, seg - dout))))
        b_cols.append(jnp.pad(bg, ((0, 0), (0, seg - dout))))
        off += seg
        hb_offs.append(off)
        w_cols.append(jnp.pad(Wb, ((0, 0), (0, seg - dout))))
        b_cols.append(jnp.zeros((1, seg), jnp.float32))
        off += seg
    W_ctx = jnp.concatenate(w_cols, axis=1).astype(jnp.float32)   # (C, G)
    b_ctx = jnp.concatenate(b_cols, axis=1).astype(jnp.float32)   # (1, G)

    layer_params = []
    for l in range(n_layers):
        layer_params += [flat_params[5 * l].astype(jnp.float32),
                         flat_params[5 * l + 1].astype(jnp.float32)]

    # Tile sizing: big tiles amortize grid overhead and fill the MXU M-dim, but
    # the Jacobian scratch scales as D * TN * max(hidden); cap TN so it stays
    # comfortably inside the scoped VMEM limit (v7x only has 64 MiB physical).
    max_h = max(dims[1:])
    j_bytes_per_row = D * max_h * (4 + 4 + 2)   # f32 J + f32 matmul out + bf16 copy
    tn_cap = max(8, (int(8 * 1024 * 1024) // max(j_bytes_per_row, 1)) // 8 * 8)
    TN = min(int(tile_n), tn_cap, ((N + 7) // 8) * 8)
    TN = max(8, (TN // 8) * 8)
    N_pad = ((N + TN - 1) // TN) * TN
    if N_pad != N:
        z_flat = jnp.pad(z_flat, ((0, N_pad - N), (0, 0)))
        ctx_static = jnp.pad(ctx_static, ((0, N_pad - N), (0, 0)))

    kernel = functools.partial(
        cnf_rk4_kernel, dims=tuple(dims), gate_offs=tuple(gate_offs),
        hb_offs=tuple(hb_offs), n_steps=int(n_steps), dt=1.0 / float(n_steps),
        tile_n=TN)

    in_specs = [
        pl.BlockSpec((TN, D), lambda i: (i, 0)),
        pl.BlockSpec((TN, C), lambda i: (i, 0)),
        pl.BlockSpec(W_ctx.shape, lambda i: (0, 0)),
        pl.BlockSpec(b_ctx.shape, lambda i: (0, 0)),
    ] + [pl.BlockSpec(p.shape, lambda i: (0, 0)) for p in layer_params]

    z_out, dlp_out = pl.pallas_call(
        kernel,
        grid=(N_pad // TN,),
        in_specs=in_specs,
        out_specs=(pl.BlockSpec((TN, D), lambda i: (i, 0)),
                   pl.BlockSpec((TN, 1), lambda i: (i, 0))),
        out_shape=(jax.ShapeDtypeStruct((N_pad, D), jnp.float32),
                   jax.ShapeDtypeStruct((N_pad, 1), jnp.float32)),
        compiler_params=pltpu.CompilerParams(
            dimension_semantics=("parallel",)),   # row tiles shard across TCs
    )(z_flat, ctx_static, W_ctx, b_ctx, *layer_params)
    return z_out[:N], dlp_out[:N]


# ---------------------------------------------------------------------------
# Parameter init (nn.Linear-style uniform), same layout as the torch module
# ---------------------------------------------------------------------------
def init_params(key, input_dim, condition_dim, hidden_dims, marginal=True):
    temporal = 2 if marginal else 1
    ctx_dim = condition_dim + temporal
    dims = [input_dim] + list(hidden_dims) + [input_dim]
    flat = []
    for i in range(len(dims) - 1):
        din, dout = dims[i], dims[i + 1]
        key, k0, k1, k2, k3, k4 = jax.random.split(key, 6)
        bw = 1.0 / float(jnp.sqrt(din))
        bc = 1.0 / float(jnp.sqrt(ctx_dim))
        W = jax.random.uniform(k0, (din, dout), jnp.float32, -bw, bw)
        b = jax.random.uniform(k1, (1, dout), jnp.float32, -bw, bw)
        Wg = jax.random.uniform(k2, (ctx_dim, dout), jnp.float32, -bc, bc)
        bg = jax.random.uniform(k3, (1, dout), jnp.float32, -bc, bc)
        Wb = jax.random.uniform(k4, (ctx_dim, dout), jnp.float32, -bc, bc)
        flat += [W, b, Wg, bg, Wb]
    return flat


# ---------------------------------------------------------------------------
# CNF.forward (marginal=True, reverse=False)
# ---------------------------------------------------------------------------
def cnf_forward(z, condition, flat_params, sampling_frequency=1,
                n_steps=8, tile_n=256):
    B, S, D = z.shape
    N = B * S

    # condition LayerNorm (gamma=1, beta=0, eps=1e-5)
    mu = condition.mean(-1, keepdims=True)
    var = condition.var(-1, keepdims=True)
    cond = (condition - mu) / jnp.sqrt(var + 1e-5)

    delta_logpz = jnp.zeros((B, S, 1), jnp.float32)

    # TODO(synk): MovingBatchNorm1d class not provided; eval-mode FFJORD variant
    # (running mean 0, var 1, identity affine) implemented in JAX glue.
    bn_eps = 1e-4
    def mbn(x, logpx):
        y = x / jnp.sqrt(1.0 + bn_eps)
        logdet = D * (-0.5 * jnp.log(1.0 + bn_eps))
        return y, logpx - logdet

    z, delta_logpz = mbn(z, delta_logpz)     # n1

    # Static per-point context [positional, t-slot(=0), condition]; the kernel
    # applies the t contribution per RK4 stage, so t never round-trips HBM.
    pos = jnp.arange(1, S + 1, dtype=jnp.float32) / float(sampling_frequency)
    pos_col = jnp.tile(pos[None, :, None], (B, 1, 1)).reshape(N, 1)
    t_col = jnp.zeros((N, 1), jnp.float32)
    cond_flat = jnp.broadcast_to(
        cond[:, None, :], (B, S, cond.shape[-1])).reshape(N, -1)
    ctx_static = jnp.concatenate([pos_col, t_col, cond_flat], axis=1)

    z_flat = z.reshape(N, D).astype(jnp.float32)

    # TODO(synk): dopri5 adaptive odeint_adjoint replaced with fixed-step RK4,
    # fully fused into a single pallas_call.
    z_f, dlp_int = cnf_rk4_pallas(z_flat, ctx_static, flat_params,
                                  n_steps=n_steps, tile_n=tile_n)

    z = z_f.reshape(B, S, D)
    delta_logpz = delta_logpz + dlp_int.reshape(B, S, 1)

    z, delta_logpz = mbn(z, delta_logpz)     # n2
    return z, delta_logpz[..., 0]            # (B,S,D), (B,S)


# ---------------------------------------------------------------------------
# Pure-JAX f32 reference (exact sigmoid, autodiff Jacobian trace) for checking
# ---------------------------------------------------------------------------
def cnf_forward_ref(z, condition, flat_params, sampling_frequency=1, n_steps=8):
    B, S, D = z.shape
    N = B * S
    n_layers = len(flat_params) // 5

    mu = condition.mean(-1, keepdims=True)
    var = condition.var(-1, keepdims=True)
    cond = (condition - mu) / jnp.sqrt(var + 1e-5)

    delta_logpz = jnp.zeros((B, S, 1), jnp.float32)
    bn_eps = 1e-4
    def mbn(x, logpx):
        y = x / jnp.sqrt(1.0 + bn_eps)
        logdet = D * (-0.5 * jnp.log(1.0 + bn_eps))
        return y, logpx - logdet

    z, delta_logpz = mbn(z, delta_logpz)

    pos = jnp.arange(1, S + 1, dtype=jnp.float32) / float(sampling_frequency)
    pos_col = jnp.tile(pos[None, :, None], (B, 1, 1)).reshape(N, 1)
    cond_flat = jnp.broadcast_to(
        cond[:, None, :], (B, S, cond.shape[-1])).reshape(N, -1)

    def zdot_row(zrow, ctxrow):
        h = zrow
        for l in range(n_layers):
            W, b, Wg, bg, Wb = flat_params[5 * l:5 * (l + 1)]
            gate = jax.nn.sigmoid(ctxrow @ Wg + bg[0])
            h = (h @ W + b[0]) * gate + ctxrow @ Wb
            if l < n_layers - 1:
                h = jnp.tanh(h)
        return h

    def f(t, zf):
        tcol = jnp.full((N, 1), t, jnp.float32)
        ctx = jnp.concatenate([pos_col, tcol, cond_flat], axis=1)
        zdot = jax.vmap(zdot_row)(zf, ctx)
        tr = jax.vmap(lambda zr, cr: jnp.trace(jax.jacfwd(zdot_row)(zr, cr)))(zf, ctx)
        return zdot, -tr[:, None]

    z_flat = z.reshape(N, D).astype(jnp.float32)
    dlp_flat = delta_logpz.reshape(N, 1)
    h = 1.0 / n_steps
    t = 0.0
    for _ in range(n_steps):
        k1z, k1l = f(t, z_flat)
        k2z, k2l = f(t + 0.5 * h, z_flat + 0.5 * h * k1z)
        k3z, k3l = f(t + 0.5 * h, z_flat + 0.5 * h * k2z)
        k4z, k4l = f(t + h, z_flat + h * k3z)
        z_flat = z_flat + (h / 6.0) * (k1z + 2.0 * k2z + 2.0 * k3z + k4z)
        dlp_flat = dlp_flat + (h / 6.0) * (k1l + 2.0 * k2l + 2.0 * k3l + k4l)
        t += h

    z = z_flat.reshape(B, S, D)
    delta_logpz = dlp_flat.reshape(B, S, 1)
    z, delta_logpz = mbn(z, delta_logpz)
    return z, delta_logpz[..., 0]


if __name__ == "__main__":
    key = jax.random.PRNGKey(0)
    kz, kc, kp = jax.random.split(key, 3)

    B, S, D, COND = 2, 8, 4, 6
    HIDDEN = (32, 32)

    z = jax.random.normal(kz, (B, S, D), jnp.float32)
    condition = jax.random.normal(kc, (B, COND), jnp.float32)
    params = init_params(kp, D, COND, HIDDEN, marginal=True)

    z_out, dlp_out = cnf_forward(z, condition, params, sampling_frequency=1)
    jax.block_until_ready((z_out, dlp_out))

    assert z_out.shape == (B, S, D)
    assert dlp_out.shape == (B, S)
    assert bool(jnp.all(jnp.isfinite(z_out))) and bool(jnp.all(jnp.isfinite(dlp_out)))

    # Loose-tolerance check vs. pure-f32 reference (kernel feeds bf16 MXU
    # operands and uses an approximate-reciprocal sigmoid, so not bit-exact).
    z_ref, dlp_ref = cnf_forward_ref(z, condition, params, sampling_frequency=1)
    err_z = float(jnp.max(jnp.abs(z_out - z_ref)))
    err_d = float(jnp.max(jnp.abs(dlp_out - dlp_ref)))
    assert err_z < 0.2 and err_d < 0.2, (err_z, err_d)

    print("KERNEL_OK")
</pallas_src>

<mosaic_0001>
module attributes {stable_mosaic.version = 11 : i64} {
  func.func @cnf_rk4_kernel(%arg0: i32, %arg1: memref<16x4xf32, #tpu.memory_space<vmem>>, %arg2: memref<16x8xf32, #tpu.memory_space<vmem>>, %arg3: memref<8x768xf32, #tpu.memory_space<vmem>>, %arg4: memref<1x768xf32, #tpu.memory_space<vmem>>, %arg5: memref<4x32xf32, #tpu.memory_space<vmem>>, %arg6: memref<1x32xf32, #tpu.memory_space<vmem>>, %arg7: memref<32x32xf32, #tpu.memory_space<vmem>>, %arg8: memref<1x32xf32, #tpu.memory_space<vmem>>, %arg9: memref<32x4xf32, #tpu.memory_space<vmem>>, %arg10: memref<1x4xf32, #tpu.memory_space<vmem>>, %arg11: memref<16x4xf32, #tpu.memory_space<vmem>>, %arg12: memref<16x1xf32, #tpu.memory_space<vmem>>) attributes {dimension_semantics = [#tpu.dimension_semantics<parallel>], iteration_bounds = array<i64: 1>, scalar_prefetch = 0 : i64, scratch_operands = 0 : i64, tpu.core_type = #tpu.core_type<tc>, window_params = [{transform_indices = @transform_0, window_bounds = array<i64: 16, 4>}, {transform_indices = @transform_1, window_bounds = array<i64: 16, 8>}, {pipeline_mode = #tpu.pipeline_mode<synchronous>, transform_indices = @transform_2, window_bounds = array<i64: 8, 768>}, {pipeline_mode = #tpu.pipeline_mode<synchronous>, transform_indices = @transform_3, window_bounds = array<i64: 1, 768>}, {pipeline_mode = #tpu.pipeline_mode<synchronous>, transform_indices = @transform_4, window_bounds = array<i64: 4, 32>}, {pipeline_mode = #tpu.pipeline_mode<synchronous>, transform_indices = @transform_5, window_bounds = array<i64: 1, 32>}, {pipeline_mode = #tpu.pipeline_mode<synchronous>, transform_indices = @transform_6, window_bounds = array<i64: 32, 32>}, {pipeline_mode = #tpu.pipeline_mode<synchronous>, transform_indices = @transform_7, window_bounds = array<i64: 1, 32>}, {pipeline_mode = #tpu.pipeline_mode<synchronous>, transform_indices = @transform_8, window_bounds = array<i64: 32, 4>}, {pipeline_mode = #tpu.pipeline_mode<synchronous>, transform_indices = @transform_9, window_bounds = array<i64: 1, 4>}, {transform_indices = @transform_10, window_bounds = array<i64: 16, 4>}, {transform_indices = @transform_11, window_bounds = array<i64: 16, 1>}]} {
    %c0 = arith.constant 0 : index
    %c0_0 = arith.constant 0 : index
    %0 = vector.load %arg1[%c0, %c0_0] : memref<16x4xf32, #tpu.memory_space<vmem>>, vector<16x4xf32>
    %c0_1 = arith.constant 0 : index
    %c0_2 = arith.constant 0 : index
    %1 = vector.load %arg2[%c0_1, %c0_2] : memref<16x8xf32, #tpu.memory_space<vmem>>, vector<16x8xf32>
    %c0_3 = arith.constant 0 : index
    %c0_4 = arith.constant 0 : index
    %2 = vector.load %arg3[%c0_3, %c0_4] : memref<8x768xf32, #tpu.memory_space<vmem>>, vector<8x768xf32>
    %c0_5 = arith.constant 0 : index
    %c0_6 = arith.constant 0 : index
    %3 = vector.load %arg4[%c0_5, %c0_6] : memref<1x768xf32, #tpu.memory_space<vmem>>, vector<1x768xf32>
    %cst = arith.constant dense<0.000000e+00> : vector<16x768xf32>
    %4 = tpu.matmul %1, %2, %cst {dimension_numbers = #tpu.dot_dimension_numbers<[1], [0], [0], [1], [0, 0, 1, 1], [], []>} : vector<16x8xf32>, vector<8x768xf32>, vector<16x768xf32> -> vector<16x768xf32>
    %5 = vector.broadcast %3 : vector<1x768xf32> to vector<16x768xf32>
    %6 = arith.addf %4, %5 : vector<16x768xf32>
    %7 = vector.extract_strided_slice %2 {offsets = [1, 0], sizes = [1, 768], strides = [1, 1]} : vector<8x768xf32> to vector<1x768xf32>
    %8 = vector.shape_cast %7 : vector<1x768xf32> to vector<1x768xf32>
    %9 = vector.broadcast %8 : vector<1x768xf32> to vector<16x768xf32>
    %c0_7 = arith.constant 0 : index
    %c0_8 = arith.constant 0 : index
    %10 = vector.load %arg5[%c0_7, %c0_8] : memref<4x32xf32, #tpu.memory_space<vmem>>, vector<4x32xf32>
    %c0_9 = arith.constant 0 : index
    %c0_10 = arith.constant 0 : index
    %11 = vector.load %arg7[%c0_9, %c0_10] : memref<32x32xf32, #tpu.memory_space<vmem>>, vector<32x32xf32>
    %c0_11 = arith.constant 0 : index
    %c0_12 = arith.constant 0 : index
    %12 = vector.load %arg9[%c0_11, %c0_12] : memref<32x4xf32, #tpu.memory_space<vmem>>, vector<32x4xf32>
    %c0_13 = arith.constant 0 : index
    %c0_14 = arith.constant 0 : index
    %13 = vector.load %arg6[%c0_13, %c0_14] : memref<1x32xf32, #tpu.memory_space<vmem>>, vector<1x32xf32>
    %c0_15 = arith.constant 0 : index
    %c0_16 = arith.constant 0 : index
    %14 = vector.load %arg8[%c0_15, %c0_16] : memref<1x32xf32, #tpu.memory_space<vmem>>, vector<1x32xf32>
    %c0_17 = arith.constant 0 : index
    %c0_18 = arith.constant 0 : index
    %15 = vector.load %arg10[%c0_17, %c0_18] : memref<1x4xf32, #tpu.memory_space<vmem>>, vector<1x4xf32>
    %16 = arith.truncf %10 : vector<4x32xf32> to vector<4x32xbf16>
    %17 = arith.truncf %11 : vector<32x32xf32> to vector<32x32xbf16>
    %18 = arith.truncf %12 : vector<32x4xf32> to vector<32x4xbf16>
    %19 = vector.shape_cast %10 : vector<4x32xf32> to vector<4x1x32xf32>
    %20 = vector.shape_cast %19 : vector<4x1x32xf32> to vector<4x1x32xf32>
    %21 = vector.broadcast %20 : vector<4x1x32xf32> to vector<4x16x32xf32>
    %22 = tpu.iota {dimensions = array<i32: 0>} : vector<4x16x4xi32>
    %23 = tpu.iota {dimensions = array<i32: 2>} : vector<4x16x4xi32>
    %24 = arith.cmpi eq, %22, %23 : vector<4x16x4xi32>
    %25 = arith.extui %24 : vector<4x16x4xi1> to vector<4x16x4xi32>
    %26 = arith.sitofp %25 : vector<4x16x4xi32> to vector<4x16x4xf32>
    %cst_19 = arith.constant 0.000000e+00 : f32
    %27 = vector.broadcast %cst_19 : f32 to vector<16x1xf32>
    %c0_i32 = arith.constant 0 : i32
    %c8_i32 = arith.constant 8 : i32
    %28 = arith.addi %c0_i32, %c8_i32 : i32
    %c1_i32 = arith.constant 1 : i32
    %29:2 = scf.for %arg13 = %c0_i32 to %28 step %c1_i32 iter_args(%arg14 = %0, %arg15 = %27) -> (vector<16x4xf32>, vector<16x1xf32>)  : i32 {
      %32 = arith.sitofp %arg13 : i32 to f32
      %cst_25 = arith.constant 1.250000e-01 : f32
      %33 = arith.mulf %32, %cst_25 : f32
      %34 = vector.broadcast %33 : f32 to vector<16x768xf32>
      %35 = arith.mulf %34, %9 : vector<16x768xf32>
      %36 = arith.addf %6, %35 : vector<16x768xf32>
      %37 = vector.extract_strided_slice %36 {offsets = [0, 0], sizes = [16, 32], strides = [1, 1]} : vector<16x768xf32> to vector<16x32xf32>
      %cst_26 = arith.constant 0.000000e+00 : f32
      %38 = vector.broadcast %cst_26 : f32 to vector<16x32xf32>
      %39 = arith.subf %38, %37 : vector<16x32xf32>
      %40 = math.exp %39 : vector<16x32xf32>
      %cst_27 = arith.constant 1.000000e+00 : f32
      %41 = vector.broadcast %cst_27 : f32 to vector<16x32xf32>
      %42 = arith.addf %41, %40 : vector<16x32xf32>
      %43 = tpu.reciprocal %42 {approx = true} : vector<16x32xf32> -> vector<16x32xf32>
      %44 = vector.extract_strided_slice %36 {offsets = [0, 128], sizes = [16, 32], strides = [1, 1]} : vector<16x768xf32> to vector<16x32xf32>
      %45 = vector.extract_strided_slice %36 {offsets = [0, 256], sizes = [16, 32], strides = [1, 1]} : vector<16x768xf32> to vector<16x32xf32>
      %cst_28 = arith.constant 0.000000e+00 : f32
      %46 = vector.broadcast %cst_28 : f32 to vector<16x32xf32>
      %47 = arith.subf %46, %45 : vector<16x32xf32>
      %48 = math.exp %47 : vector<16x32xf32>
      %cst_29 = arith.constant 1.000000e+00 : f32
      %49 = vector.broadcast %cst_29 : f32 to vector<16x32xf32>
      %50 = arith.addf %49, %48 : vector<16x32xf32>
      %51 = tpu.reciprocal %50 {approx = true} : vector<16x32xf32> -> vector<16x32xf32>
      %52 = vector.extract_strided_slice %36 {offsets = [0, 384], sizes = [16, 32], strides = [1, 1]} : vector<16x768xf32> to vector<16x32xf32>
      %53 = vector.extract_strided_slice %36 {offsets = [0, 512], sizes = [16, 4], strides = [1, 1]} : vector<16x768xf32> to vector<16x4xf32>
      %cst_30 = arith.constant 0.000000e+00 : f32
      %54 = vector.broadcast %cst_30 : f32 to vector<16x4xf32>
      %55 = arith.subf %54, %53 : vector<16x4xf32>
      %56 = math.exp %55 : vector<16x4xf32>
      %cst_31 = arith.constant 1.000000e+00 : f32
      %57 = vector.broadcast %cst_31 : f32 to vector<16x4xf32>
      %58 = arith.addf %57, %56 : vector<16x4xf32>
      %59 = tpu.reciprocal %58 {approx = true} : vector<16x4xf32> -> vector<16x4xf32>
      %60 = vector.extract_strided_slice %36 {offsets = [0, 640], sizes = [16, 4], strides = [1, 1]} : vector<16x768xf32> to vector<16x4xf32>
      %cst_32 = arith.constant 6.250000e-02 : f32
      %61 = arith.addf %33, %cst_32 : f32
      %62 = vector.broadcast %61 : f32 to vector<16x768xf32>
      %63 = arith.mulf %62, %9 : vector<16x768xf32>
      %64 = arith.addf %6, %63 : vector<16x768xf32>
      %65 = vector.extract_strided_slice %64 {offsets = [0, 0], sizes = [16, 32], strides = [1, 1]} : vector<16x768xf32> to vector<16x32xf32>
      %cst_33 = arith.constant 0.000000e+00 : f32
      %66 = vector.broadcast %cst_33 : f32 to vector<16x32xf32>
      %67 = arith.subf %66, %65 : vector<16x32xf32>
      %68 = math.exp %67 : vector<16x32xf32>
      %cst_34 = arith.constant 1.000000e+00 : f32
      %69 = vector.broadcast %cst_34 : f32 to vector<16x32xf32>
      %70 = arith.addf %69, %68 : vector<16x32xf32>
      %71 = tpu.reciprocal %70 {approx = true} : vector<16x32xf32> -> vector<16x32xf32>
      %72 = vector.extract_strided_slice %64 {offsets = [0, 128], sizes = [16, 32], strides = [1, 1]} : vector<16x768xf32> to vector<16x32xf32>
      %73 = vector.extract_strided_slice %64 {offsets = [0, 256], sizes = [16, 32], strides = [1, 1]} : vector<16x768xf32> to vector<16x32xf32>
      %cst_35 = arith.constant 0.000000e+00 : f32
      %74 = vector.broadcast %cst_35 : f32 to vector<16x32xf32>
      %75 = arith.subf %74, %73 : vector<16x32xf32>
      %76 = math.exp %75 : vector<16x32xf32>
      %cst_36 = arith.constant 1.000000e+00 : f32
      %77 = vector.broadcast %cst_36 : f32 to vector<16x32xf32>
      %78 = arith.addf %77, %76 : vector<16x32xf32>
      %79 = tpu.reciprocal %78 {approx = true} : vector<16x32xf32> -> vector<16x32xf32>
      %80 = vector.extract_strided_slice %64 {offsets = [0, 384], sizes = [16, 32], strides = [1, 1]} : vector<16x768xf32> to vector<16x32xf32>
      %81 = vector.extract_strided_slice %64 {offsets = [0, 512], sizes = [16, 4], strides = [1, 1]} : vector<16x768xf32> to vector<16x4xf32>
      %cst_37 = arith.constant 0.000000e+00 : f32
      %82 = vector.broadcast %cst_37 : f32 to vector<16x4xf32>
      %83 = arith.subf %82, %81 : vector<16x4xf32>
      %84 = math.exp %83 : vector<16x4xf32>
      %cst_38 = arith.constant 1.000000e+00 : f32
      %85 = vector.broadcast %cst_38 : f32 to vector<16x4xf32>
      %86 = arith.addf %85, %84 : vector<16x4xf32>
      %87 = tpu.reciprocal %86 {approx = true} : vector<16x4xf32> -> vector<16x4xf32>
      %88 = vector.extract_strided_slice %64 {offsets = [0, 640], sizes = [16, 4], strides = [1, 1]} : vector<16x768xf32> to vector<16x4xf32>
      %cst_39 = arith.constant 1.250000e-01 : f32
      %89 = arith.addf %33, %cst_39 : f32
      %90 = vector.broadcast %89 : f32 to vector<16x768xf32>
      %91 = arith.mulf %90, %9 : vector<16x768xf32>
      %92 = arith.addf %6, %91 : vector<16x768xf32>
      %93 = vector.extract_strided_slice %92 {offsets = [0, 0], sizes = [16, 32], strides = [1, 1]} : vector<16x768xf32> to vector<16x32xf32>
      %cst_40 = arith.constant 0.000000e+00 : f32
      %94 = vector.broadcast %cst_40 : f32 to vector<16x32xf32>
      %95 = arith.subf %94, %93 : vector<16x32xf32>
      %96 = math.exp %95 : vector<16x32xf32>
      %cst_41 = arith.constant 1.000000e+00 : f32
      %97 = vector.broadcast %cst_41 : f32 to vector<16x32xf32>
      %98 = arith.addf %97, %96 : vector<16x32xf32>
      %99 = tpu.reciprocal %98 {approx = true} : vector<16x32xf32> -> vector<16x32xf32>
      %100 = vector.extract_strided_slice %92 {offsets = [0, 128], sizes = [16, 32], strides = [1, 1]} : vector<16x768xf32> to vector<16x32xf32>
      %101 = vector.extract_strided_slice %92 {offsets = [0, 256], sizes = [16, 32], strides = [1, 1]} : vector<16x768xf32> to vector<16x32xf32>
      %cst_42 = arith.constant 0.000000e+00 : f32
      %102 = vector.broadcast %cst_42 : f32 to vector<16x32xf32>
      %103 = arith.subf %102, %101 : vector<16x32xf32>
      %104 = math.exp %103 : vector<16x32xf32>
      %cst_43 = arith.constant 1.000000e+00 : f32
      %105 = vector.broadcast %cst_43 : f32 to vector<16x32xf32>
      %106 = arith.addf %105, %104 : vector<16x32xf32>
      %107 = tpu.reciprocal %106 {approx = true} : vector<16x32xf32> -> vector<16x32xf32>
      %108 = vector.extract_strided_slice %92 {offsets = [0, 384], sizes = [16, 32], strides = [1, 1]} : vector<16x768xf32> to vector<16x32xf32>
      %109 = vector.extract_strided_slice %92 {offsets = [0, 512], sizes = [16, 4], strides = [1, 1]} : vector<16x768xf32> to vector<16x4xf32>
      %cst_44 = arith.constant 0.000000e+00 : f32
      %110 = vector.broadcast %cst_44 : f32 to vector<16x4xf32>
      %111 = arith.subf %110, %109 : vector<16x4xf32>
      %112 = math.exp %111 : vector<16x4xf32>
      %cst_45 = arith.constant 1.000000e+00 : f32
      %113 = vector.broadcast %cst_45 : f32 to vector<16x4xf32>
      %114 = arith.addf %113, %112 : vector<16x4xf32>
      %115 = tpu.reciprocal %114 {approx = true} : vector<16x4xf32> -> vector<16x4xf32>
      %116 = vector.extract_strided_slice %92 {offsets = [0, 640], sizes = [16, 4], strides = [1, 1]} : vector<16x768xf32> to vector<16x4xf32>
      %117 = arith.truncf %arg14 : vector<16x4xf32> to vector<16x4xbf16>
      %cst_46 = arith.constant dense<0.000000e+00> : vector<16x32xf32>
      %118 = tpu.matmul %117, %16, %cst_46 {dimension_numbers = #tpu.dot_dimension_numbers<[1], [0], [0], [1], [0, 0, 1, 1], [], []>} : vector<16x4xbf16>, vector<4x32xbf16>, vector<16x32xf32> -> vector<16x32xf32>
      %119 = vector.broadcast %13 : vector<1x32xf32> to vector<16x32xf32>
      %120 = arith.addf %118, %119 : vector<16x32xf32>
      %121 = arith.mulf %120, %43 : vector<16x32xf32>
      %122 = arith.addf %121, %44 : vector<16x32xf32>
      %123 = math.tanh %122 : vector<16x32xf32>
      %124 = arith.mulf %123, %123 : vector<16x32xf32>
      %cst_47 = arith.constant 1.000000e+00 : f32
      %125 = vector.broadcast %cst_47 : f32 to vector<16x32xf32>
      %126 = arith.subf %125, %124 : vector<16x32xf32>
      %127 = arith.mulf %43, %126 : vector<16x32xf32>
      %128 = vector.shape_cast %127 : vector<16x32xf32> to vector<1x16x32xf32>
      %129 = vector.broadcast %128 : vector<1x16x32xf32> to vector<4x16x32xf32>
      %130 = arith.mulf %21, %129 : vector<4x16x32xf32>
      %131 = arith.truncf %123 : vector<16x32xf32> to vector<16x32xbf16>
      %cst_48 = arith.constant dense<0.000000e+00> : vector<16x32xf32>
      %132 = tpu.matmul %131, %17, %cst_48 {dimension_numbers = #tpu.dot_dimension_numbers<[1], [0], [0], [1], [0, 0, 1, 1], [], []>} : vector<16x32xbf16>, vector<32x32xbf16>, vector<16x32xf32> -> vector<16x32xf32>
      %133 = vector.broadcast %14 : vector<1x32xf32> to vector<16x32xf32>
      %134 = arith.addf %132, %133 : vector<16x32xf32>
      %135 = arith.mulf %134, %51 : vector<16x32xf32>
      %136 = arith.addf %135, %52 : vector<16x32xf32>
      %137 = math.tanh %136 : vector<16x32xf32>
      %138 = arith.mulf %137, %137 : vector<16x32xf32>
      %cst_49 = arith.constant 1.000000e+00 : f32
      %139 = vector.broadcast %cst_49 : f32 to vector<16x32xf32>
      %140 = arith.subf %139, %138 : vector<16x32xf32>
      %141 = arith.mulf %51, %140 : vector<16x32xf32>
      %142 = vector.shape_cast %130 : vector<4x16x32xf32> to vector<64x32xf32>
      %143 = arith.truncf %142 : vector<64x32xf32> to vector<64x32xbf16>
      %cst_50 = arith.constant dense<0.000000e+00> : vector<64x32xf32>
      %144 = tpu.matmul %143, %17, %cst_50 {dimension_numbers = #tpu.dot_dimension_numbers<[1], [0], [0], [1], [0, 0, 1, 1], [], []>} : vector<64x32xbf16>, vector<32x32xbf16>, vector<64x32xf32> -> vector<64x32xf32>
      %145 = vector.shape_cast %144 : vector<64x32xf32> to vector<4x16x32xf32>
      %146 = vector.shape_cast %141 : vector<16x32xf32> to vector<1x16x32xf32>
      %147 = vector.broadcast %146 : vector<1x16x32xf32> to vector<4x16x32xf32>
      %148 = arith.mulf %145, %147 : vector<4x16x32xf32>
      %149 = arith.truncf %137 : vector<16x32xf32> to vector<16x32xbf16>
      %cst_51 = arith.constant dense<0.000000e+00> : vector<16x4xf32>
      %150 = tpu.matmul %149, %18, %cst_51 {dimension_numbers = #tpu.dot_dimension_numbers<[1], [0], [0], [1], [0, 0, 1, 1], [], []>} : vector<16x32xbf16>, vector<32x4xbf16>, vector<16x4xf32> -> vector<16x4xf32>
      %151 = vector.broadcast %15 : vector<1x4xf32> to vector<16x4xf32>
      %152 = arith.addf %150, %151 : vector<16x4xf32>
      %153 = arith.mulf %152, %59 : vector<16x4xf32>
      %154 = arith.addf %153, %60 : vector<16x4xf32>
      %155 = vector.shape_cast %148 : vector<4x16x32xf32> to vector<64x32xf32>
      %156 = arith.truncf %155 : vector<64x32xf32> to vector<64x32xbf16>
      %cst_52 = arith.constant dense<0.000000e+00> : vector<64x4xf32>
      %157 = tpu.matmul %156, %18, %cst_52 {dimension_numbers = #tpu.dot_dimension_numbers<[1], [0], [0], [1], [0, 0, 1, 1], [], []>} : vector<64x32xbf16>, vector<32x4xbf16>, vector<64x4xf32> -> vector<64x4xf32>
      %158 = vector.shape_cast %157 : vector<64x4xf32> to vector<4x16x4xf32>
      %159 = vector.shape_cast %59 : vector<16x4xf32> to vector<1x16x4xf32>
      %160 = vector.broadcast %159 : vector<1x16x4xf32> to vector<4x16x4xf32>
      %161 = arith.mulf %158, %160 : vector<4x16x4xf32>
      %162 = arith.mulf %161, %26 : vector<4x16x4xf32>
      %cst_53 = arith.constant dense<0.000000e+00> : vector<16x4xf32>
      %163 = vector.multi_reduction <add>, %162, %cst_53 [0] : vector<4x16x4xf32> to vector<16x4xf32>
      %cst_54 = arith.constant dense<0.000000e+00> : vector<16xf32>
      %164 = vector.multi_reduction <add>, %163, %cst_54 [1] : vector<16x4xf32> to vector<16xf32>
      %165 = vector.shape_cast %164 : vector<16xf32> to vector<16x1xf32>
      %cst_55 = arith.constant 6.250000e-02 : f32
      %166 = vector.broadcast %cst_55 : f32 to vector<16x4xf32>
      %167 = arith.mulf %166, %154 : vector<16x4xf32>
      %168 = arith.addf %arg14, %167 : vector<16x4xf32>
      %169 = arith.truncf %168 : vector<16x4xf32> to vector<16x4xbf16>
      %cst_56 = arith.constant dense<0.000000e+00> : vector<16x32xf32>
      %170 = tpu.matmul %169, %16, %cst_56 {dimension_numbers = #tpu.dot_dimension_numbers<[1], [0], [0], [1], [0, 0, 1, 1], [], []>} : vector<16x4xbf16>, vector<4x32xbf16>, vector<16x32xf32> -> vector<16x32xf32>
      %171 = vector.broadcast %13 : vector<1x32xf32> to vector<16x32xf32>
      %172 = arith.addf %170, %171 : vector<16x32xf32>
      %173 = arith.mulf %172, %71 : vector<16x32xf32>
      %174 = arith.addf %173, %72 : vector<16x32xf32>
      %175 = math.tanh %174 : vector<16x32xf32>
      %176 = arith.mulf %175, %175 : vector<16x32xf32>
      %cst_57 = arith.constant 1.000000e+00 : f32
      %177 = vector.broadcast %cst_57 : f32 to vector<16x32xf32>
      %178 = arith.subf %177, %176 : vector<16x32xf32>
      %179 = arith.mulf %71, %178 : vector<16x32xf32>
      %180 = vector.shape_cast %179 : vector<16x32xf32> to vector<1x16x32xf32>
      %181 = vector.broadcast %180 : vector<1x16x32xf32> to vector<4x16x32xf32>
      %182 = arith.mulf %21, %181 : vector<4x16x32xf32>
      %183 = arith.truncf %175 : vector<16x32xf32> to vector<16x32xbf16>
      %cst_58 = arith.constant dense<0.000000e+00> : vector<16x32xf32>
      %184 = tpu.matmul %183, %17, %cst_58 {dimension_numbers = #tpu.dot_dimension_numbers<[1], [0], [0], [1], [0, 0, 1, 1], [], []>} : vector<16x32xbf16>, vector<32x32xbf16>, vector<16x32xf32> -> vector<16x32xf32>
      %185 = vector.broadcast %14 : vector<1x32xf32> to vector<16x32xf32>
      %186 = arith.addf %184, %185 : vector<16x32xf32>
      %187 = arith.mulf %186, %79 : vector<16x32xf32>
      %188 = arith.addf %187, %80 : vector<16x32xf32>
      %189 = math.tanh %188 : vector<16x32xf32>
      %190 = arith.mulf %189, %189 : vector<16x32xf32>
      %cst_59 = arith.constant 1.000000e+00 : f32
      %191 = vector.broadcast %cst_59 : f32 to vector<16x32xf32>
      %192 = arith.subf %191, %190 : vector<16x32xf32>
      %193 = arith.mulf %79, %192 : vector<16x32xf32>
      %194 = vector.shape_cast %182 : vector<4x16x32xf32> to vector<64x32xf32>
      %195 = arith.truncf %194 : vector<64x32xf32> to vector<64x32xbf16>
      %cst_60 = arith.constant dense<0.000000e+00> : vector<64x32xf32>
      %196 = tpu.matmul %195, %17, %cst_60 {dimension_numbers = #tpu.dot_dimension_numbers<[1], [0], [0], [1], [0, 0, 1, 1], [], []>} : vector<64x32xbf16>, vector<32x32xbf16>, vector<64x32xf32> -> vector<64x32xf32>
      %197 = vector.shape_cast %196 : vector<64x32xf32> to vector<4x16x32xf32>
      %198 = vector.shape_cast %193 : vector<16x32xf32> to vector<1x16x32xf32>
      %199 = vector.broadcast %198 : vector<1x16x32xf32> to vector<4x16x32xf32>
      %200 = arith.mulf %197, %199 : vector<4x16x32xf32>
      %201 = arith.truncf %189 : vector<16x32xf32> to vector<16x32xbf16>
      %cst_61 = arith.constant dense<0.000000e+00> : vector<16x4xf32>
      %202 = tpu.matmul %201, %18, %cst_61 {dimension_numbers = #tpu.dot_dimension_numbers<[1], [0], [0], [1], [0, 0, 1, 1], [], []>} : vector<16x32xbf16>, vector<32x4xbf16>, vector<16x4xf32> -> vector<16x4xf32>
      %203 = vector.broadcast %15 : vector<1x4xf32> to vector<16x4xf32>
      %204 = arith.addf %202, %203 : vector<16x4xf32>
      %205 = arith.mulf %204, %87 : vector<16x4xf32>
      %206 = arith.addf %205, %88 : vector<16x4xf32>
      %207 = vector.shape_cast %200 : vector<4x16x32xf32> to vector<64x32xf32>
      %208 = arith.truncf %207 : vector<64x32xf32> to vector<64x32xbf16>
      %cst_62 = arith.constant dense<0.000000e+00> : vector<64x4xf32>
      %209 = tpu.matmul %208, %18, %cst_62 {dimension_numbers = #tpu.dot_dimension_numbers<[1], [0], [0], [1], [0, 0, 1, 1], [], []>} : vector<64x32xbf16>, vector<32x4xbf16>, vector<64x4xf32> -> vector<64x4xf32>
      %210 = vector.shape_cast %209 : vector<64x4xf32> to vector<4x16x4xf32>
      %211 = vector.shape_cast %87 : vector<16x4xf32> to vector<1x16x4xf32>
      %212 = vector.broadcast %211 : vector<1x16x4xf32> to vector<4x16x4xf32>
      %213 = arith.mulf %210, %212 : vector<4x16x4xf32>
      %214 = arith.mulf %213, %26 : vector<4x16x4xf32>
      %cst_63 = arith.constant dense<0.000000e+00> : vector<16x4xf32>
      %215 = vector.multi_reduction <add>, %214, %cst_63 [0] : vector<4x16x4xf32> to vector<16x4xf32>
      %cst_64 = arith.constant dense<0.000000e+00> : vector<16xf32>
      %216 = vector.multi_reduction <add>, %215, %cst_64 [1] : vector<16x4xf32> to vector<16xf32>
      %217 = vector.shape_cast %216 : vector<16xf32> to vector<16x1xf32>
      %cst_65 = arith.constant 6.250000e-02 : f32
      %218 = vector.broadcast %cst_65 : f32 to vector<16x4xf32>
      %219 = arith.mulf %218, %206 : vector<16x4xf32>
      %220 = arith.addf %arg14, %219 : vector<16x4xf32>
      %221 = arith.truncf %220 : vector<16x4xf32> to vector<16x4xbf16>
      %cst_66 = arith.constant dense<0.000000e+00> : vector<16x32xf32>
      %222 = tpu.matmul %221, %16, %cst_66 {dimension_numbers = #tpu.dot_dimension_numbers<[1], [0], [0], [1], [0, 0, 1, 1], [], []>} : vector<16x4xbf16>, vector<4x32xbf16>, vector<16x32xf32> -> vector<16x32xf32>
      %223 = vector.broadcast %13 : vector<1x32xf32> to vector<16x32xf32>
      %224 = arith.addf %222, %223 : vector<16x32xf32>
      %225 = arith.mulf %224, %71 : vector<16x32xf32>
      %226 = arith.addf %225, %72 : vector<16x32xf32>
      %227 = math.tanh %226 : vector<16x32xf32>
      %228 = arith.mulf %227, %227 : vector<16x32xf32>
      %cst_67 = arith.constant 1.000000e+00 : f32
      %229 = vector.broadcast %cst_67 : f32 to vector<16x32xf32>
      %230 = arith.subf %229, %228 : vector<16x32xf32>
      %231 = arith.mulf %71, %230 : vector<16x32xf32>
      %232 = vector.shape_cast %231 : vector<16x32xf32> to vector<1x16x32xf32>
      %233 = vector.broadcast %232 : vector<1x16x32xf32> to vector<4x16x32xf32>
      %234 = arith.mulf %21, %233 : vector<4x16x32xf32>
      %235 = arith.truncf %227 : vector<16x32xf32> to vector<16x32xbf16>
      %cst_68 = arith.constant dense<0.000000e+00> : vector<16x32xf32>
      %236 = tpu.matmul %235, %17, %cst_68 {dimension_numbers = #tpu.dot_dimension_numbers<[1], [0], [0], [1], [0, 0, 1, 1], [], []>} : vector<16x32xbf16>, vector<32x32xbf16>, vector<16x32xf32> -> vector<16x32xf32>
      %237 = vector.broadcast %14 : vector<1x32xf32> to vector<16x32xf32>
      %238 = arith.addf %236, %237 : vector<16x32xf32>
      %239 = arith.mulf %238, %79 : vector<16x32xf32>
      %240 = arith.addf %239, %80 : vector<16x32xf32>
      %241 = math.tanh %240 : vector<16x32xf32>
      %242 = arith.mulf %241, %241 : vector<16x32xf32>
      %cst_69 = arith.constant 1.000000e+00 : f32
      %243 = vector.broadcast %cst_69 : f32 to vector<16x32xf32>
      %244 = arith.subf %243, %242 : vector<16x32xf32>
      %245 = arith.mulf %79, %244 : vector<16x32xf32>
      %246 = vector.shape_cast %234 : vector<4x16x32xf32> to vector<64x32xf32>
      %247 = arith.truncf %246 : vector<64x32xf32> to vector<64x32xbf16>
      %cst_70 = arith.constant dense<0.000000e+00> : vector<64x32xf32>
      %248 = tpu.matmul %247, %17, %cst_70 {dimension_numbers = #tpu.dot_dimension_numbers<[1], [0], [0], [1], [0, 0, 1, 1], [], []>} : vector<64x32xbf16>, vector<32x32xbf16>, vector<64x32xf32> -> vector<64x32xf32>
      %249 = vector.shape_cast %248 : vector<64x32xf32> to vector<4x16x32xf32>
      %250 = vector.shape_cast %245 : vector<16x32xf32> to vector<1x16x32xf32>
      %251 = vector.broadcast %250 : vector<1x16x32xf32> to vector<4x16x32xf32>
      %252 = arith.mulf %249, %251 : vector<4x16x32xf32>
      %253 = arith.truncf %241 : vector<16x32xf32> to vector<16x32xbf16>
      %cst_71 = arith.constant dense<0.000000e+00> : vector<16x4xf32>
      %254 = tpu.matmul %253, %18, %cst_71 {dimension_numbers = #tpu.dot_dimension_numbers<[1], [0], [0], [1], [0, 0, 1, 1], [], []>} : vector<16x32xbf16>, vector<32x4xbf16>, vector<16x4xf32> -> vector<16x4xf32>
      %255 = vector.broadcast %15 : vector<1x4xf32> to vector<16x4xf32>
      %256 = arith.addf %254, %255 : vector<16x4xf32>
      %257 = arith.mulf %256, %87 : vector<16x4xf32>
      %258 = arith.addf %257, %88 : vector<16x4xf32>
      %259 = vector.shape_cast %252 : vector<4x16x32xf32> to vector<64x32xf32>
      %260 = arith.truncf %259 : vector<64x32xf32> to vector<64x32xbf16>
      %cst_72 = arith.constant dense<0.000000e+00> : vector<64x4xf32>
      %261 = tpu.matmul %260, %18, %cst_72 {dimension_numbers = #tpu.dot_dimension_numbers<[1], [0], [0], [1], [0, 0, 1, 1], [], []>} : vector<64x32xbf16>, vector<32x4xbf16>, vector<64x4xf32> -> vector<64x4xf32>
      %262 = vector.shape_cast %261 : vector<64x4xf32> to vector<4x16x4xf32>
      %263 = vector.shape_cast %87 : vector<16x4xf32> to vector<1x16x4xf32>
      %264 = vector.broadcast %263 : vector<1x16x4xf32> to vector<4x16x4xf32>
      %265 = arith.mulf %262, %264 : vector<4x16x4xf32>
      %266 = arith.mulf %265, %26 : vector<4x16x4xf32>
      %cst_73 = arith.constant dense<0.000000e+00> : vector<16x4xf32>
      %267 = vector.multi_reduction <add>, %266, %cst_73 [0] : vector<4x16x4xf32> to vector<16x4xf32>
      %cst_74 = arith.constant dense<0.000000e+00> : vector<16xf32>
      %268 = vector.multi_reduction <add>, %267, %cst_74 [1] : vector<16x4xf32> to vector<16xf32>
      %269 = vector.shape_cast %268 : vector<16xf32> to vector<16x1xf32>
      %cst_75 = arith.constant 1.250000e-01 : f32
      %270 = vector.broadcast %cst_75 : f32 to vector<16x4xf32>
      %271 = arith.mulf %270, %258 : vector<16x4xf32>
      %272 = arith.addf %arg14, %271 : vector<16x4xf32>
      %273 = arith.truncf %272 : vector<16x4xf32> to vector<16x4xbf16>
      %cst_76 = arith.constant dense<0.000000e+00> : vector<16x32xf32>
      %274 = tpu.matmul %273, %16, %cst_76 {dimension_numbers = #tpu.dot_dimension_numbers<[1], [0], [0], [1], [0, 0, 1, 1], [], []>} : vector<16x4xbf16>, vector<4x32xbf16>, vector<16x32xf32> -> vector<16x32xf32>
      %275 = vector.broadcast %13 : vector<1x32xf32> to vector<16x32xf32>
      %276 = arith.addf %274, %275 : vector<16x32xf32>
      %277 = arith.mulf %276, %99 : vector<16x32xf32>
      %278 = arith.addf %277, %100 : vector<16x32xf32>
      %279 = math.tanh %278 : vector<16x32xf32>
      %280 = arith.mulf %279, %279 : vector<16x32xf32>
      %cst_77 = arith.constant 1.000000e+00 : f32
      %281 = vector.broadcast %cst_77 : f32 to vector<16x32xf32>
      %282 = arith.subf %281, %280 : vector<16x32xf32>
      %283 = arith.mulf %99, %282 : vector<16x32xf32>
      %284 = vector.shape_cast %283 : vector<16x32xf32> to vector<1x16x32xf32>
      %285 = vector.broadcast %284 : vector<1x16x32xf32> to vector<4x16x32xf32>
      %286 = arith.mulf %21, %285 : vector<4x16x32xf32>
      %287 = arith.truncf %279 : vector<16x32xf32> to vector<16x32xbf16>
      %cst_78 = arith.constant dense<0.000000e+00> : vector<16x32xf32>
      %288 = tpu.matmul %287, %17, %cst_78 {dimension_numbers = #tpu.dot_dimension_numbers<[1], [0], [0], [1], [0, 0, 1, 1], [], []>} : vector<16x32xbf16>, vector<32x32xbf16>, vector<16x32xf32> -> vector<16x32xf32>
      %289 = vector.broadcast %14 : vector<1x32xf32> to vector<16x32xf32>
      %290 = arith.addf %288, %289 : vector<16x32xf32>
      %291 = arith.mulf %290, %107 : vector<16x32xf32>
      %292 = arith.addf %291, %108 : vector<16x32xf32>
      %293 = math.tanh %292 : vector<16x32xf32>
      %294 = arith.mulf %293, %293 : vector<16x32xf32>
      %cst_79 = arith.constant 1.000000e+00 : f32
      %295 = vector.broadcast %cst_79 : f32 to vector<16x32xf32>
      %296 = arith.subf %295, %294 : vector<16x32xf32>
      %297 = arith.mulf %107, %296 : vector<16x32xf32>
      %298 = vector.shape_cast %286 : vector<4x16x32xf32> to vector<64x32xf32>
      %299 = arith.truncf %298 : vector<64x32xf32> to vector<64x32xbf16>
      %cst_80 = arith.constant dense<0.000000e+00> : vector<64x32xf32>
      %300 = tpu.matmul %299, %17, %cst_80 {dimension_numbers = #tpu.dot_dimension_numbers<[1], [0], [0], [1], [0, 0, 1, 1], [], []>} : vector<64x32xbf16>, vector<32x32xbf16>, vector<64x32xf32> -> vector<64x32xf32>
      %301 = vector.shape_cast %300 : vector<64x32xf32> to vector<4x16x32xf32>
      %302 = vector.shape_cast %297 : vector<16x32xf32> to vector<1x16x32xf32>
      %303 = vector.broadcast %302 : vector<1x16x32xf32> to vector<4x16x32xf32>
      %304 = arith.mulf %301, %303 : vector<4x16x32xf32>
      %305 = arith.truncf %293 : vector<16x32xf32> to vector<16x32xbf16>
      %cst_81 = arith.constant dense<0.000000e+00> : vector<16x4xf32>
      %306 = tpu.matmul %305, %18, %cst_81 {dimension_numbers = #tpu.dot_dimension_numbers<[1], [0], [0], [1], [0, 0, 1, 1], [], []>} : vector<16x32xbf16>, vector<32x4xbf16>, vector<16x4xf32> -> vector<16x4xf32>
      %307 = vector.broadcast %15 : vector<1x4xf32> to vector<16x4xf32>
      %308 = arith.addf %306, %307 : vector<16x4xf32>
      %309 = arith.mulf %308, %115 : vector<16x4xf32>
      %310 = arith.addf %309, %116 : vector<16x4xf32>
      %311 = vector.shape_cast %304 : vector<4x16x32xf32> to vector<64x32xf32>
      %312 = arith.truncf %311 : vector<64x32xf32> to vector<64x32xbf16>
      %cst_82 = arith.constant dense<0.000000e+00> : vector<64x4xf32>
      %313 = tpu.matmul %312, %18, %cst_82 {dimension_numbers = #tpu.dot_dimension_numbers<[1], [0], [0], [1], [0, 0, 1, 1], [], []>} : vector<64x32xbf16>, vector<32x4xbf16>, vector<64x4xf32> -> vector<64x4xf32>
      %314 = vector.shape_cast %313 : vector<64x4xf32> to vector<4x16x4xf32>
      %315 = vector.shape_cast %115 : vector<16x4xf32> to vector<1x16x4xf32>
      %316 = vector.broadcast %315 : vector<1x16x4xf32> to vector<4x16x4xf32>
      %317 = arith.mulf %314, %316 : vector<4x16x4xf32>
      %318 = arith.mulf %317, %26 : vector<4x16x4xf32>
      %cst_83 = arith.constant dense<0.000000e+00> : vector<16x4xf32>
      %319 = vector.multi_reduction <add>, %318, %cst_83 [0] : vector<4x16x4xf32> to vector<16x4xf32>
      %cst_84 = arith.constant dense<0.000000e+00> : vector<16xf32>
      %320 = vector.multi_reduction <add>, %319, %cst_84 [1] : vector<16x4xf32> to vector<16xf32>
      %321 = vector.shape_cast %320 : vector<16xf32> to vector<16x1xf32>
      %cst_85 = arith.constant 2.000000e+00 : f32
      %322 = vector.broadcast %cst_85 : f32 to vector<16x4xf32>
      %323 = arith.mulf %322, %206 : vector<16x4xf32>
      %324 = arith.addf %154, %323 : vector<16x4xf32>
      %cst_86 = arith.constant 2.000000e+00 : f32
      %325 = vector.broadcast %cst_86 : f32 to vector<16x4xf32>
      %326 = arith.mulf %325, %258 : vector<16x4xf32>
      %327 = arith.addf %324, %326 : vector<16x4xf32>
      %328 = arith.addf %327, %310 : vector<16x4xf32>
      %cst_87 = arith.constant 0.020833334 : f32
      %329 = vector.broadcast %cst_87 : f32 to vector<16x4xf32>
      %330 = arith.mulf %329, %328 : vector<16x4xf32>
      %331 = arith.addf %arg14, %330 : vector<16x4xf32>
      %cst_88 = arith.constant 2.000000e+00 : f32
      %332 = vector.broadcast %cst_88 : f32 to vector<16x1xf32>
      %333 = arith.mulf %332, %217 : vector<16x1xf32>
      %334 = arith.addf %165, %333 : vector<16x1xf32>
      %cst_89 = arith.constant 2.000000e+00 : f32
      %335 = vector.broadcast %cst_89 : f32 to vector<16x1xf32>
      %336 = arith.mulf %335, %269 : vector<16x1xf32>
      %337 = arith.addf %334, %336 : vector<16x1xf32>
      %338 = arith.addf %337, %321 : vector<16x1xf32>
      %cst_90 = arith.constant 0.020833334 : f32
      %339 = vector.broadcast %cst_90 : f32 to vector<16x1xf32>
      %340 = arith.mulf %339, %338 : vector<16x1xf32>
      %341 = arith.subf %arg15, %340 : vector<16x1xf32>
      scf.yield %331, %341 : vector<16x4xf32>, vector<16x1xf32>
    }
    %c8_i32_20 = arith.constant 8 : i32
    %c0_21 = arith.constant 0 : index
    %c0_22 = arith.constant 0 : index
    %30 = vector.load %arg11[%c0_21, %c0_22] : memref<16x4xf32, #tpu.memory_space<vmem>>, vector<16x4xf32>
    tpu.vector_store %arg11[%c0_21, %c0_22], %29#0 {strides = array<i32>} : memref<16x4xf32, #tpu.memory_space<vmem>>, vector<16x4xf32>,
    %c0_23 = arith.constant 0 : index
    %c0_24 = arith.constant 0 : index
    %31 = vector.load %arg12[%c0_23, %c0_24] : memref<16x1xf32, #tpu.memory_space<vmem>>, vector<16x1xf32>
    tpu.vector_store %arg12[%c0_23, %c0_24], %29#1 {strides = array<i32>} : memref<16x1xf32, #tpu.memory_space<vmem>>, vector<16x1xf32>,
    return
  }
  func.func @transform_0(%arg0: i32) -> (i32, i32) {
    %c0_i32 = arith.constant 0 : i32
    %c0_i32_0 = arith.constant 0 : i32
    return %arg0, %c0_i32 : i32, i32
  }
  func.func @transform_1(%arg0: i32) -> (i32, i32) {
    %c0_i32 = arith.constant 0 : i32
    %c0_i32_0 = arith.constant 0 : i32
    return %arg0, %c0_i32 : i32, i32
  }
  func.func @transform_2(%arg0: i32) -> (i32, i32) {
    %c0_i32 = arith.constant 0 : i32
    %c0_i32_0 = arith.constant 0 : i32
    %c0_i32_1 = arith.constant 0 : i32
    return %c0_i32, %c0_i32_0 : i32, i32
  }
  func.func @transform_3(%arg0: i32) -> (i32, i32) {
    %c0_i32 = arith.constant 0 : i32
    %c0_i32_0 = arith.constant 0 : i32
    %c0_i32_1 = arith.constant 0 : i32
    return %c0_i32, %c0_i32_0 : i32, i32
  }
  func.func @transform_4(%arg0: i32) -> (i32, i32) {
    %c0_i32 = arith.constant 0 : i32
    %c0_i32_0 = arith.constant 0 : i32
    %c0_i32_1 = arith.constant 0 : i32
    return %c0_i32, %c0_i32_0 : i32, i32
  }
  func.func @transform_5(%arg0: i32) -> (i32, i32) {
    %c0_i32 = arith.constant 0 : i32
    %c0_i32_0 = arith.constant 0 : i32
    %c0_i32_1 = arith.constant 0 : i32
    return %c0_i32, %c0_i32_0 : i32, i32
  }
  func.func @transform_6(%arg0: i32) -> (i32, i32) {
    %c0_i32 = arith.constant 0 : i32
    %c0_i32_0 = arith.constant 0 : i32
    %c0_i32_1 = arith.constant 0 : i32
    return %c0_i32, %c0_i32_0 : i32, i32
  }
  func.func @transform_7(%arg0: i32) -> (i32, i32) {
    %c0_i32 = arith.constant 0 : i32
    %c0_i32_0 = arith.constant 0 : i32
    %c0_i32_1 = arith.constant 0 : i32
    return %c0_i32, %c0_i32_0 : i32, i32
  }
  func.func @transform_8(%arg0: i32) -> (i32, i32) {
    %c0_i32 = arith.constant 0 : i32
    %c0_i32_0 = arith.constant 0 : i32
    %c0_i32_1 = arith.constant 0 : i32
    return %c0_i32, %c0_i32_0 : i32, i32
  }
  func.func @transform_9(%arg0: i32) -> (i32, i32) {
    %c0_i32 = arith.constant 0 : i32
    %c0_i32_0 = arith.constant 0 : i32
    %c0_i32_1 = arith.constant 0 : i32
    return %c0_i32, %c0_i32_0 : i32, i32
  }
  func.func @transform_10(%arg0: i32) -> (i32, i32) {
    %c0_i32 = arith.constant 0 : i32
    %c0_i32_0 = arith.constant 0 : i32
    return %arg0, %c0_i32 : i32, i32
  }
  func.func @transform_11(%arg0: i32) -> (i32, i32) {
    %c0_i32 = arith.constant 0 : i32
    %c0_i32_0 = arith.constant 0 : i32
    return %arg0, %c0_i32 : i32, i32
  }
}

</mosaic_0001>

<llo_original>
// kernel: tpu_custom_call.1
$region0: #{tpu_custom_call.1}
  #allocation0 [shape = 'u32[]', space=smem, size = 0x4, offset = 0x4, fixed_abs, tag = 'smem constant byte address 0x4 - core index']
  #allocation1 [shape = 'u32[144,128]{1,0:T(1,128)}', space=vmem, size = 0x12000, scoped, tag = 'internal scratch']
  %s0 = inlined_call_operand.vmem [shape: f32[16,4], index: 0, kind: input, shape index: {}]
  %s1 = inlined_call_operand.vmem [shape: f32[16,8], index: 1, kind: input, shape index: {}]
  %s2 = inlined_call_operand.vmem [shape: f32[8,768], index: 2, kind: input, shape index: {}]
  %s3 = inlined_call_operand.vmem [shape: f32[1,768], index: 3, kind: input, shape index: {}]
  %s4 = inlined_call_operand.vmem [shape: f32[4,32], index: 4, kind: input, shape index: {}]
  %s5 = inlined_call_operand.vmem [shape: f32[1,32], index: 5, kind: input, shape index: {}]
  %s6 = inlined_call_operand.vmem [shape: f32[32,32], index: 6, kind: input, shape index: {}]
  %s7 = inlined_call_operand.vmem [shape: f32[1,32], index: 7, kind: input, shape index: {}]
  %s8 = inlined_call_operand.vmem [shape: f32[32,4], index: 8, kind: input, shape index: {}]
  %s9 = inlined_call_operand.vmem [shape: f32[1,4], index: 9, kind: input, shape index: {}]
  %s10 = inlined_call_operand.vmem [shape: f32[16,4], index: 10, kind: output, shape index: {0}]
  %s11 = inlined_call_operand.vmem [shape: f32[16,1], index: 11, kind: output, shape index: {1}]
  %12 = xla_tuple %s10, %s11
  %s13 = sld [smem:[#allocation0]]
  $region65: #{tpu_custom_call.1} parent=0
    _
  %s15 = ssub.s32 1, %s13
  %s16 = scalar_select 0, %s15, %s13
  // Predicated region
  $region2: #{tpu_custom_call.1} parent=0 // pred_check
    _
  $region3: #{tpu_custom_call.1} parent=0 // pred_check_branch
    %18 = sbr.rel (0) target = $region5
  $region4: #{tpu_custom_call.1} parent=0 // pred_region
    _
  $region5: #{tpu_custom_call.1} parent=0 // pred_fallthru
    _
  // Predicated region
  $region6: #{tpu_custom_call.1} parent=0 // pred_check
    _
  $region7: #{tpu_custom_call.1} parent=0 // pred_check_branch
    %20 = sbr.rel (0) target = $region9
  $region8: #{tpu_custom_call.1} parent=0 // pred_region
    _
  $region9: #{tpu_custom_call.1} parent=0 // pred_fallthru
    _
  // Predicated region
  $region10: #{tpu_custom_call.1} parent=0 // pred_check
    _
  $region11: #{tpu_custom_call.1} parent=0 // pred_check_branch
    %22 = sbr.rel (0) target = $region13
  $region12: #{tpu_custom_call.1} parent=0 // pred_region
    _
  $region13: #{tpu_custom_call.1} parent=0 // pred_fallthru
    _
  // Predicated region
  $region14: #{tpu_custom_call.1} parent=0 // pred_check
    _
  $region15: #{tpu_custom_call.1} parent=0 // pred_check_branch
    %24 = sbr.rel (0) target = $region17
  $region16: #{tpu_custom_call.1} parent=0 // pred_region
    _
  $region17: #{tpu_custom_call.1} parent=0 // pred_fallthru
    _
  // Predicated region
  $region18: #{tpu_custom_call.1} parent=0 // pred_check
    _
  $region19: #{tpu_custom_call.1} parent=0 // pred_check_branch
    %26 = sbr.rel (0) target = $region21
  $region20: #{tpu_custom_call.1} parent=0 // pred_region
    _
  $region21: #{tpu_custom_call.1} parent=0 // pred_fallthru
    _
  // Predicated region
  $region22: #{tpu_custom_call.1} parent=0 // pred_check
    _
  $region23: #{tpu_custom_call.1} parent=0 // pred_check_branch
    %28 = sbr.rel (0) target = $region25
  $region24: #{tpu_custom_call.1} parent=0 // pred_region
    _
  $region25: #{tpu_custom_call.1} parent=0 // pred_fallthru
    _
  // Predicated region
  $region26: #{tpu_custom_call.1} parent=0 // pred_check
    _
  $region27: #{tpu_custom_call.1} parent=0 // pred_check_branch
    %30 = sbr.rel (0) target = $region29
  $region28: #{tpu_custom_call.1} parent=0 // pred_region
    _
  $region29: #{tpu_custom_call.1} parent=0 // pred_fallthru
    _
  // Predicated region
  $region30: #{tpu_custom_call.1} parent=0 // pred_check
    _
  $region31: #{tpu_custom_call.1} parent=0 // pred_check_branch
    %32 = sbr.rel (0) target = $region33
  $region32: #{tpu_custom_call.1} parent=0 // pred_region
    _
  $region33: #{tpu_custom_call.1} parent=0 // pred_fallthru
    _
  // Predicated region
  $region34: #{tpu_custom_call.1} parent=0 // pred_check
    _
  $region35: #{tpu_custom_call.1} parent=0 // pred_check_branch
    %34 = sbr.rel (0) target = $region37
  $region36: #{tpu_custom_call.1} parent=0 // pred_region
    _
  $region37: #{tpu_custom_call.1} parent=0 // pred_fallthru
    _
  // Predicated region
  $region38: #{tpu_custom_call.1} parent=0 // pred_check
    _
  $region39: #{tpu_custom_call.1} parent=0 // pred_check_branch
    %36 = sbr.rel (0) target = $region41
  $region40: #{tpu_custom_call.1} parent=0 // pred_region
    _
  $region41: #{tpu_custom_call.1} parent=0 // pred_fallthru
    _
  %v38 = vld [vmem:[%s0] sm:$0xff]
  %v39 = vld [vmem:[%s0 + $0x8] sm:$0xff]
  %v40 = vld [vmem:[%s1] sm:$0xff]
  %v41 = vld [vmem:[%s1 + $0x8] sm:$0xff]
  %v42 = vld [vmem:[%s2] sm:$0xff]
  %v43 = vld [vmem:[%s2 + $0x8] sm:$0xff]
  %v44 = vld [vmem:[%s2 + $0x10] sm:$0xff]
  %v45 = vld [vmem:[%s2 + $0x18] sm:$0xff]
  %v46 = vld [vmem:[%s2 + $0x20] sm:$0xff]
  %v47 = vld [vmem:[%s2 + $0x28] sm:$0xff]
  %v48 = vld [vmem:[%s3] sm:$0x3f]
  %v50 = vlaneseq
  %v51 = vshrl.u32 %v50, 7
  %v52 = vsub.s32 0, %v51
  %v53 = vrot.slane %v48, %v52
  %v54 = vlaneseq
  %v55 = vshrl.u32 %v54, 7
  %v56 = vsub.s32 1, %v55
  %v57 = vrot.slane %v48, %v56
  %v58 = vlaneseq
  %v59 = vshrl.u32 %v58, 7
  %v60 = vsub.s32 2, %v59
  %v61 = vrot.slane %v48, %v60
  %v62 = vlaneseq
  %v63 = vshrl.u32 %v62, 7
  %v64 = vsub.s32 3, %v63
  %v65 = vrot.slane %v48, %v64
  %v66 = vlaneseq
  %v67 = vshrl.u32 %v66, 7
  %v68 = vsub.s32 4, %v67
  %v69 = vrot.slane %v48, %v68
  %v70 = vlaneseq
  %v71 = vshrl.u32 %v70, 7
  %v72 = vsub.s32 5, %v71
  %v73 = vrot.slane %v48, %v72
  %vm80 = vcmask 64512
  %v82 = vsel %vm80, %v40, 0
  %v85 = vsel %vm80, %v41, 0
  %87 = vmatprep.subr.mxu0 %v43
  %88 = vmatpush1.msra.mxu0 %v42
  %89 = vmatprep.subr.mxu0 0.0
  %90 = vmatpush1.msra.mxu0 0.0
  %91 = vmatprep.subr.mxu0 0.0
  %92 = vmatpush1.msra.mxu0 0.0
  %93 = vmatprep.subr.mxu0 0.0
  %94 = vmatpush1.msra.mxu0 0.0
  %95 = vmatprep.subr.mxu0 0.0
  %96 = vmatpush1.msra.mxu0 0.0
  %97 = vmatprep.subr.mxu0 0.0
  %98 = vmatpush1.msra.mxu0 0.0
  %99 = vmatprep.subr.mxu0 0.0
  %100 = vmatpush1.msra.mxu0 0.0
  %101 = vmatprep.subr.mxu0 0.0
  %102 = vmatpush1.msra.mxu0 0.0
  %103 = vmatprep.subr.mxu0 0.0
  %104 = vmatpush1.msra.mxu0 0.0
  %105 = vmatprep.subr.mxu0 0.0
  %106 = vmatpush1.msra.mxu0 0.0
  %107 = vmatprep.subr.mxu0 0.0
  %108 = vmatpush1.msra.mxu0 0.0
  %109 = vmatprep.subr.mxu0 0.0
  %110 = vmatpush1.msra.mxu0 0.0
  %111 = vmatprep.subr.mxu0 0.0
  %112 = vmatpush1.msra.mxu0 0.0
  %113 = vmatprep.subr.mxu0 0.0
  %114 = vmatpush1.msra.mxu0 0.0
  %115 = vmatprep.subr.mxu0 0.0
  %116 = vmatpush1.msra.mxu0 0.0
  %117 = vmatprep.subr.mxu0 0.0
  %118 = vmatpush1.msra.mxu0 0.0
  %119 = vmatprep.subr.mxu0 0.0
  %120 = vmatpush1.msra.mxu0 0.0
  %121 = vmatprep.subr.mxu0 0.0
  %122 = vmatpush1.msra.mxu0 0.0
  %123 = vmatprep.subr.mxu0 0.0
  %124 = vmatpush1.msra.mxu0 0.0
  %125 = vmatprep.subr.mxu0 0.0
  %126 = vmatpush1.msra.mxu0 0.0
  %127 = vmatprep.subr.mxu0 0.0
  %128 = vmatpush1.msra.mxu0 0.0
  %129 = vmatprep.subr.mxu0 0.0
  %130 = vmatpush1.msra.mxu0 0.0
  %131 = vmatprep.subr.mxu0 0.0
  %132 = vmatpush1.msra.mxu0 0.0
  %133 = vmatprep.subr.mxu0 0.0
  %134 = vmatpush1.msra.mxu0 0.0
  %135 = vmatprep.subr.mxu0 0.0
  %136 = vmatpush1.msra.mxu0 0.0
  %137 = vmatprep.subr.mxu0 0.0
  %138 = vmatpush1.msra.mxu0 0.0
  %139 = vmatprep.subr.mxu0 0.0
  %140 = vmatpush1.msra.mxu0 0.0
  %141 = vmatprep.subr.mxu0 0.0
  %142 = vmatpush1.msra.mxu0 0.0
  %143 = vmatprep.subr.mxu0 0.0
  %144 = vmatpush1.msra.mxu0 0.0
  %145 = vmatprep.subr.mxu0 0.0
  %146 = vmatpush1.msra.mxu0 0.0
  %147 = vmatprep.subr.mxu0 0.0
  %148 = vmatpush1.msra.mxu0 0.0
  %149 = vmatprep.subr.mxu0 0.0
  %150 = vmatpush1.msra.mxu0 0.0
  %151 = vmatprep.mubr.f32.mxu0 0.0
  %152 = vmatmul.mubr.f32.gmra.mrb[0].mxu0 %v82
  %v153 = vpop.f32.mrb[0].mxu0
  %v154 = vadd.f32 %v53, %v153
  %v155 = vpop.f32.mrb[0].mxu0
  %v156 = vadd.f32 %v57, %v155
  %157 = vmatprep.mubr.f32.mxu0 0.0
  %158 = vmatmul.mubr.f32.gmra.mrb[0].mxu0 %v85
  %v159 = vpop.f32.mrb[0].mxu0
  %v160 = vadd.f32 %v53, %v159
  %v161 = vpop.f32.mrb[0].mxu0
  %v162 = vadd.f32 %v57, %v161
  %163 = vdwg.mxu0
  %164 = vmatprep.subr.mxu0 %v45
  %165 = vmatpush1.msra.mxu0 %v44
  %166 = vmatprep.subr.mxu0 0.0
  %167 = vmatpush1.msra.mxu0 0.0
  %168 = vmatprep.subr.mxu0 0.0
  %169 = vmatpush1.msra.mxu0 0.0
  %170 = vmatprep.subr.mxu0 0.0
  %171 = vmatpush1.msra.mxu0 0.0
  %172 = vmatprep.subr.mxu0 0.0
  %173 = vmatpush1.msra.mxu0 0.0
  %174 = vmatprep.subr.mxu0 0.0
  %175 = vmatpush1.msra.mxu0 0.0
  %176 = vmatprep.subr.mxu0 0.0
  %177 = vmatpush1.msra.mxu0 0.0
  %178 = vmatprep.subr.mxu0 0.0
  %179 = vmatpush1.msra.mxu0 0.0
  %180 = vmatprep.subr.mxu0 0.0
  %181 = vmatpush1.msra.mxu0 0.0
  %182 = vmatprep.subr.mxu0 0.0
  %183 = vmatpush1.msra.mxu0 0.0
  %184 = vmatprep.subr.mxu0 0.0
  %185 = vmatpush1.msra.mxu0 0.0
  %186 = vmatprep.subr.mxu0 0.0
  %187 = vmatpush1.msra.mxu0 0.0
  %188 = vmatprep.subr.mxu0 0.0
  %189 = vmatpush1.msra.mxu0 0.0
  %190 = vmatprep.subr.mxu0 0.0
  %191 = vmatpush1.msra.mxu0 0.0
  %192 = vmatprep.subr.mxu0 0.0
  %193 = vmatpush1.msra.mxu0 0.0
  %194 = vmatprep.subr.mxu0 0.0
  %195 = vmatpush1.msra.mxu0 0.0
  %196 = vmatprep.subr.mxu0 0.0
  %197 = vmatpush1.msra.mxu0 0.0
  %198 = vmatprep.subr.mxu0 0.0
  %199 = vmatpush1.msra.mxu0 0.0
  %200 = vmatprep.subr.mxu0 0.0
  %201 = vmatpush1.msra.mxu0 0.0
  %202 = vmatprep.subr.mxu0 0.0
  %203 = vmatpush1.msra.mxu0 0.0
  %204 = vmatprep.subr.mxu0 0.0
  %205 = vmatpush1.msra.mxu0 0.0
  %206 = vmatprep.subr.mxu0 0.0
  %207 = vmatpush1.msra.mxu0 0.0
  %208 = vmatprep.subr.mxu0 0.0
  %209 = vmatpush1.msra.mxu0 0.0
  %210 = vmatprep.subr.mxu0 0.0
  %211 = vmatpush1.msra.mxu0 0.0
  %212 = vmatprep.subr.mxu0 0.0
  %213 = vmatpush1.msra.mxu0 0.0
  %214 = vmatprep.subr.mxu0 0.0
  %215 = vmatpush1.msra.mxu0 0.0
  %216 = vmatprep.subr.mxu0 0.0
  %217 = vmatpush1.msra.mxu0 0.0
  %218 = vmatprep.subr.mxu0 0.0
  %219 = vmatpush1.msra.mxu0 0.0
  %220 = vmatprep.subr.mxu0 0.0
  %221 = vmatpush1.msra.mxu0 0.0
  %222 = vmatprep.subr.mxu0 0.0
  %223 = vmatpush1.msra.mxu0 0.0
  %224 = vmatprep.subr.mxu0 0.0
  %225 = vmatpush1.msra.mxu0 0.0
  %226 = vmatprep.subr.mxu0 0.0
  %227 = vmatpush1.msra.mxu0 0.0
  %228 = vmatprep.mubr.f32.mxu0 0.0
  %229 = vmatmul.mubr.f32.gmra.mrb[0].mxu0 %v82
  %v230 = vpop.f32.mrb[0].mxu0
  %v231 = vadd.f32 %v61, %v230
  %v232 = vpop.f32.mrb[0].mxu0
  %v233 = vadd.f32 %v65, %v232
  %234 = vmatprep.mubr.f32.mxu0 0.0
  %235 = vmatmul.mubr.f32.gmra.mrb[0].mxu0 %v85
  %v236 = vpop.f32.mrb[0].mxu0
  %v237 = vadd.f32 %v61, %v236
  %v238 = vpop.f32.mrb[0].mxu0
  %v239 = vadd.f32 %v65, %v238
  %240 = vdwg.mxu0
  %241 = vmatprep.subr.mxu0 %v47
  %242 = vmatpush1.msra.mxu0 %v46
  %243 = vmatprep.subr.mxu0 0.0
  %244 = vmatpush1.msra.mxu0 0.0
  %245 = vmatprep.subr.mxu0 0.0
  %246 = vmatpush1.msra.mxu0 0.0
  %247 = vmatprep.subr.mxu0 0.0
  %248 = vmatpush1.msra.mxu0 0.0
  %249 = vmatprep.subr.mxu0 0.0
  %250 = vmatpush1.msra.mxu0 0.0
  %251 = vmatprep.subr.mxu0 0.0
  %252 = vmatpush1.msra.mxu0 0.0
  %253 = vmatprep.subr.mxu0 0.0
  %254 = vmatpush1.msra.mxu0 0.0
  %255 = vmatprep.subr.mxu0 0.0
  %256 = vmatpush1.msra.mxu0 0.0
  %257 = vmatprep.subr.mxu0 0.0
  %258 = vmatpush1.msra.mxu0 0.0
  %259 = vmatprep.subr.mxu0 0.0
  %260 = vmatpush1.msra.mxu0 0.0
  %261 = vmatprep.subr.mxu0 0.0
  %262 = vmatpush1.msra.mxu0 0.0
  %263 = vmatprep.subr.mxu0 0.0
  %264 = vmatpush1.msra.mxu0 0.0
  %265 = vmatprep.subr.mxu0 0.0
  %266 = vmatpush1.msra.mxu0 0.0
  %267 = vmatprep.subr.mxu0 0.0
  %268 = vmatpush1.msra.mxu0 0.0
  %269 = vmatprep.subr.mxu0 0.0
  %270 = vmatpush1.msra.mxu0 0.0
  %271 = vmatprep.subr.mxu0 0.0
  %272 = vmatpush1.msra.mxu0 0.0
  %273 = vmatprep.subr.mxu0 0.0
  %274 = vmatpush1.msra.mxu0 0.0
  %275 = vmatprep.subr.mxu0 0.0
  %276 = vmatpush1.msra.mxu0 0.0
  %277 = vmatprep.subr.mxu0 0.0
  %278 = vmatpush1.msra.mxu0 0.0
  %279 = vmatprep.subr.mxu0 0.0
  %280 = vmatpush1.msra.mxu0 0.0
  %281 = vmatprep.subr.mxu0 0.0
  %282 = vmatpush1.msra.mxu0 0.0
  %283 = vmatprep.subr.mxu0 0.0
  %284 = vmatpush1.msra.mxu0 0.0
  %285 = vmatprep.subr.mxu0 0.0
  %286 = vmatpush1.msra.mxu0 0.0
  %287 = vmatprep.subr.mxu0 0.0
  %288 = vmatpush1.msra.mxu0 0.0
  %289 = vmatprep.subr.mxu0 0.0
  %290 = vmatpush1.msra.mxu0 0.0
  %291 = vmatprep.subr.mxu0 0.0
  %292 = vmatpush1.msra.mxu0 0.0
  %293 = vmatprep.subr.mxu0 0.0
  %294 = vmatpush1.msra.mxu0 0.0
  %295 = vmatprep.subr.mxu0 0.0
  %296 = vmatpush1.msra.mxu0 0.0
  %297 = vmatprep.subr.mxu0 0.0
  %298 = vmatpush1.msra.mxu0 0.0
  %299 = vmatprep.subr.mxu0 0.0
  %300 = vmatpush1.msra.mxu0 0.0
  %301 = vmatprep.subr.mxu0 0.0
  %302 = vmatpush1.msra.mxu0 0.0
  %303 = vmatprep.subr.mxu0 0.0
  %304 = vmatpush1.msra.mxu0 0.0
  %305 = vmatprep.mubr.f32.mxu0 0.0
  %306 = vmatmul.mubr.f32.gmra.mrb[0].mxu0 %v82
  %v307 = vpop.f32.mrb[0].mxu0
  %v308 = vadd.f32 %v69, %v307
  %v309 = vpop.f32.mrb[0].mxu0
  %v310 = vadd.f32 %v73, %v309
  %311 = vmatprep.mubr.f32.mxu0 0.0
  %312 = vmatmul.mubr.f32.gmra.mrb[0].mxu0 %v85
  %v313 = vpop.f32.mrb[0].mxu0
  %v314 = vadd.f32 %v69, %v313
  %v315 = vpop.f32.mrb[0].mxu0
  %v316 = vadd.f32 %v73, %v315
  %317 = vdwg.mxu0
  %v318 = vlaneseq
  %v319 = vshrl.u32 %v318, 7
  %v320 = vsub.s32 1, %v319
  %v321 = vrot.slane %v42, %v320
  %v322 = vlaneseq
  %v323 = vshrl.u32 %v322, 7
  %v324 = vsub.s32 1, %v323
  %v325 = vrot.slane %v43, %v324
  %v326 = vlaneseq
  %v327 = vshrl.u32 %v326, 7
  %v328 = vsub.s32 1, %v327
  %v329 = vrot.slane %v44, %v328
  %v330 = vlaneseq
  %v331 = vshrl.u32 %v330, 7
  %v332 = vsub.s32 1, %v331
  %v333 = vrot.slane %v45, %v332
  %v334 = vlaneseq
  %v335 = vshrl.u32 %v334, 7
  %v336 = vsub.s32 1, %v335
  %v337 = vrot.slane %v46, %v336
  %v338 = vlaneseq
  %v339 = vshrl.u32 %v338, 7
  %v340 = vsub.s32 1, %v339
  %v341 = vrot.slane %v47, %v340
  %v342 = vld [vmem:[%s4] sm:$0xf]
  %v343 = vld [vmem:[%s6] sm:$0xff]
  %v344 = vld [vmem:[%s6 + $0x8] sm:$0xff]
  %v345 = vld [vmem:[%s6 + $0x10] sm:$0xff]
  %v346 = vld [vmem:[%s6 + $0x18] sm:$0xff]
  %v347 = vld [vmem:[%s8] sm:$0xff]
  %v348 = vld [vmem:[%s8 + $0x8] sm:$0xff]
  %v349 = vld [vmem:[%s8 + $0x10] sm:$0xff]
  %v350 = vld [vmem:[%s8 + $0x18] sm:$0xff]
  %v351 = vld [vmem:[%s5] sm:$0x1]
  %v352 = vld [vmem:[%s7] sm:$0x1]
  %v353 = vld [vmem:[%s9] sm:$0x1]
  %v354 = vpack.c.bf16 %v342, %v342
  %v355 = vpack.c.bf16 %v344, %v343
  %v356 = vpack.c.bf16 %v346, %v345
  %v357 = vpack.c.bf16 %v348, %v347
  %v358 = vpack.c.bf16 %v350, %v349
  %v361 = vunpack.c.l.s4 1966171168
  %v362 = vunpack.c.0.s8 %v361
  %v363 = vlaneseq
  %v364 = vshrl.u32 %v363, 7
  %v365 = vsub.s32 %v362, %v364
  %v366 = vrot.slane %v342, %v365
  %v367 = vcombine.high %v366, %v366
  %v369 = vunpack.c.l.s4 1966171168
  %v370 = vunpack.c.0.s8 %v369
  %v371 = vlaneseq
  %v372 = vshrl.u32 %v371, 7
  %v373 = vsub.s32 %v370, %v372
  %v374 = vrot.slane %v366, %v373
  %v376 = vunpack.c.l.s4 1966171168
  %v377 = vunpack.c.0.s8 %v376
  %v378 = vlaneseq
  %v379 = vshrl.u32 %v378, 7
  %v380 = vsub.s32 %v377, %v379
  %v381 = vrot.slane %v367, %v380
  %v382 = vcombine.high %v374, %v374
  %v383 = vcombine.high %v381, %v381
  %v384 = vlaneseq
  %v385 = vshrl.u32 %v384, 7
  %v386 = vsub.s32 0, %v385
  %v387 = vrot.slane %v374, %v386
  %v388 = vlaneseq
  %v389 = vshrl.u32 %v388, 7
  %v390 = vsub.s32 0, %v389
  %v391 = vrot.slane %v381, %v390
  %v392 = vlaneseq
  %v393 = vshrl.u32 %v392, 7
  %v394 = vsub.s32 0, %v393
  %v395 = vrot.slane %v382, %v394
  %v396 = vlaneseq
  %v397 = vshrl.u32 %v396, 7
  %v398 = vsub.s32 0, %v397
  %v399 = vrot.slane %v383, %v398
  %v404 = vlaneseq
  %v405 = vand.u32 %v404, 127
  %vm406 = vcmp.eq.s32.totalorder %v405, 0
  %vm407 = vcmp.eq.s32.totalorder %v405, 1
  %vm408 = vcmp.eq.s32.totalorder %v405, 2
  %vm409 = vcmp.eq.s32.totalorder %v405, 3
  %v410 = vsel %vm406, 1, 0
  %v411 = vsel %vm407, 1, 0
  %v412 = vsel %vm408, 1, 0
  %v413 = vsel %vm409, 1, 0
  %v414 = vcvt.s32.f32 %v410
  %v415 = vcvt.s32.f32 %v411
  %v416 = vcvt.s32.f32 %v412
  %v417 = vcvt.s32.f32 %v413
  loop: start=0, step=1, limit=8
  $region42: #{tpu_custom_call.1} parent=0 // loop_pre_header
    _
  $region43: #{tpu_custom_call.1} parent=0 // loop_header
    %s419 = sphi 0, %s423
    %p420 = scmp.ge.s32.totalorder %s419, 8
    %v424 = vphi %v38, %v2135
    %v425 = vphi %v39, %v2136
    %v426 = vphi 0.0, %v2149
    %v427 = vphi 0.0, %v2150
  $region44: #{tpu_custom_call.1} parent=0 // loop_header_branch
    %422 = sbr.rel (%p420) target = $region48
  $region45: #{tpu_custom_call.1} parent=0 // loop_body
    %s428 = scvt.s32.f32 %s419
    %s429 = smul.f32 %s428, 0.125
    %v430 = vstv %s429
    %v431 = vmul.f32 %v430, %v321
    %v432 = vmul.f32 %v430, %v325
    %v433 = vmul.f32 %v430, %v329
    %v434 = vmul.f32 %v430, %v333
    %v435 = vmul.f32 %v430, %v337
    %v436 = vmul.f32 %v430, %v341
    %v437 = vadd.f32 %v154, %v431
    %v438 = vadd.f32 %v156, %v432
    %v439 = vadd.f32 %v231, %v433
    %v440 = vadd.f32 %v233, %v434
    %v441 = vadd.f32 %v308, %v435
    %v442 = vadd.f32 %v310, %v436
    %v443 = vadd.f32 %v160, %v431
    %v444 = vadd.f32 %v162, %v432
    %v445 = vadd.f32 %v237, %v433
    %v446 = vadd.f32 %v239, %v434
    %v447 = vadd.f32 %v314, %v435
    %v448 = vadd.f32 %v316, %v436
    %v449 = vsub.f32 0.0, %v437
    %v450 = vsub.f32 0.0, %v443
    %v451 = vmul.f32 %v449, 1.442695
    %v452 = vpow.pop %v451
    %v453 = vmul.f32 %v450, 1.442695
    %v454 = vpow.pop %v453
    %v455 = vadd.f32 %v452, 1.0
    %v456 = vadd.f32 %v454, 1.0
    %v457 = vrcp.pop %v455
    %v458 = vrcp.pop %v456
    %v459 = vsub.f32 0.0, %v439
    %v460 = vsub.f32 0.0, %v445
    %v461 = vmul.f32 %v459, 1.442695
    %v462 = vpow.pop %v461
    %v463 = vmul.f32 %v460, 1.442695
    %v464 = vpow.pop %v463
    %v465 = vadd.f32 %v462, 1.0
    %v466 = vadd.f32 %v464, 1.0
    %v467 = vrcp.pop %v465
    %v468 = vrcp.pop %v466
    %v469 = vsub.f32 0.0, %v441
    %v470 = vsub.f32 0.0, %v447
    %v471 = vmul.f32 %v469, 1.442695
    %v472 = vpow.pop %v471
    %v473 = vmul.f32 %v470, 1.442695
    %v474 = vpow.pop %v473
    %v475 = vadd.f32 %v472, 1.0
    %v476 = vadd.f32 %v474, 1.0
    %v477 = vrcp.pop %v475
    %v478 = vrcp.pop %v476
    %s479 = sadd.f32 %s429, 0.0625
    %v480 = vstv %s479
    %v481 = vmul.f32 %v480, %v321
    %v482 = vmul.f32 %v480, %v325
    %v483 = vmul.f32 %v480, %v329
    %v484 = vmul.f32 %v480, %v333
    %v485 = vmul.f32 %v480, %v337
    %v486 = vmul.f32 %v480, %v341
    %v487 = vadd.f32 %v154, %v481
    %v488 = vadd.f32 %v156, %v482
    %v489 = vadd.f32 %v231, %v483
    %v490 = vadd.f32 %v233, %v484
    %v491 = vadd.f32 %v308, %v485
    %v492 = vadd.f32 %v310, %v486
    %v493 = vadd.f32 %v160, %v481
    %v494 = vadd.f32 %v162, %v482
    %v495 = vadd.f32 %v237, %v483
    %v496 = vadd.f32 %v239, %v484
    %v497 = vadd.f32 %v314, %v485
    %v498 = vadd.f32 %v316, %v486
    %v499 = vsub.f32 0.0, %v487
    %v500 = vsub.f32 0.0, %v493
    %v501 = vmul.f32 %v499, 1.442695
    %v502 = vpow.pop %v501
    %v503 = vmul.f32 %v500, 1.442695
    %v504 = vpow.pop %v503
    %v505 = vadd.f32 %v502, 1.0
    %v506 = vadd.f32 %v504, 1.0
    %v507 = vrcp.pop %v505
    %v508 = vrcp.pop %v506
    %v509 = vsub.f32 0.0, %v489
    %v510 = vsub.f32 0.0, %v495
    %v511 = vmul.f32 %v509, 1.442695
    %v512 = vpow.pop %v511
    %v513 = vmul.f32 %v510, 1.442695
    %v514 = vpow.pop %v513
    %v515 = vadd.f32 %v512, 1.0
    %v516 = vadd.f32 %v514, 1.0
    %v517 = vrcp.pop %v515
    %v518 = vrcp.pop %v516
    %v519 = vsub.f32 0.0, %v491
    %v520 = vsub.f32 0.0, %v497
    %v521 = vmul.f32 %v519, 1.442695
    %v522 = vpow.pop %v521
    %v523 = vmul.f32 %v520, 1.442695
    %v524 = vpow.pop %v523
    %v525 = vadd.f32 %v522, 1.0
    %v526 = vadd.f32 %v524, 1.0
    %v527 = vrcp.pop %v525
    %v528 = vrcp.pop %v526
    %s529 = sadd.f32 %s429, 0.125
    %v530 = vstv %s529
    %v531 = vmul.f32 %v530, %v321
    %v532 = vmul.f32 %v530, %v325
    %v533 = vmul.f32 %v530, %v329
    %v534 = vmul.f32 %v530, %v333
    %v535 = vmul.f32 %v530, %v337
    %v536 = vmul.f32 %v530, %v341
    %v537 = vadd.f32 %v154, %v531
    %v538 = vadd.f32 %v156, %v532
    %v539 = vadd.f32 %v231, %v533
    %v540 = vadd.f32 %v233, %v534
    %v541 = vadd.f32 %v308, %v535
    %v542 = vadd.f32 %v310, %v536
    %v543 = vadd.f32 %v160, %v531
    %v544 = vadd.f32 %v162, %v532
    %v545 = vadd.f32 %v237, %v533
    %v546 = vadd.f32 %v239, %v534
    %v547 = vadd.f32 %v314, %v535
    %v548 = vadd.f32 %v316, %v536
    %v549 = vsub.f32 0.0, %v537
    %v550 = vsub.f32 0.0, %v543
    %v551 = vmul.f32 %v549, 1.442695
    %v552 = vpow.pop %v551
    %v553 = vmul.f32 %v550, 1.442695
    %v554 = vpow.pop %v553
    %v555 = vadd.f32 %v552, 1.0
    %v556 = vadd.f32 %v554, 1.0
    %v557 = vrcp.pop %v555
    %v558 = vrcp.pop %v556
    %v559 = vsub.f32 0.0, %v539
    %v560 = vsub.f32 0.0, %v545
    %v561 = vmul.f32 %v559, 1.442695
    %v562 = vpow.pop %v561
    %v563 = vmul.f32 %v560, 1.442695
    %v564 = vpow.pop %v563
    %v565 = vadd.f32 %v562, 1.0
    %v566 = vadd.f32 %v564, 1.0
    %v567 = vrcp.pop %v565
    %v568 = vrcp.pop %v566
    %v569 = vsub.f32 0.0, %v541
    %v570 = vsub.f32 0.0, %v547
    %v571 = vmul.f32 %v569, 1.442695
    %v572 = vpow.pop %v571
    %v573 = vmul.f32 %v570, 1.442695
    %v574 = vpow.pop %v573
    %v575 = vadd.f32 %v572, 1.0
    %v576 = vadd.f32 %v574, 1.0
    %v577 = vrcp.pop %v575
    %v578 = vrcp.pop %v576
    %v579 = vpack.c.bf16 %v425, %v424
    %v581 = vlaneseq
    %v582 = vshrl.u32 %v581, 7
    %v583 = vsub.s32 0, %v582
    %v584 = vrot.slane %v351, %v583
    %vm586 = vcmask 31744
    %v588 = vsel %vm586, %v579, 0
    %vm590 = vcmask 1041408
    %v592 = vsel %vm590, %v354, 0
    %594 = vmatprep.subr.bf16.mxu0 0
    %595 = vmatpush1.bf16.msra.mxu0 %v592
    %596 = vmatprep.subr.bf16.mxu0 0
    %597 = vmatpush1.bf16.msra.mxu0 0
    %598 = vmatprep.subr.bf16.mxu0 0
    %599 = vmatpush1.bf16.msra.mxu0 0
    %600 = vmatprep.subr.bf16.mxu0 0
    %601 = vmatpush1.bf16.msra.mxu0 0
    %602 = vmatprep.subr.bf16.mxu0 0
    %603 = vmatpush1.bf16.msra.mxu0 0
    %604 = vmatprep.subr.bf16.mxu0 0
    %605 = vmatpush1.bf16.msra.mxu0 0
    %606 = vmatprep.subr.bf16.mxu0 0
    %607 = vmatpush1.bf16.msra.mxu0 0
    %608 = vmatprep.subr.bf16.mxu0 0
    %609 = vmatpush1.bf16.msra.mxu0 0
    %610 = vmatprep.subr.bf16.mxu0 0
    %611 = vmatpush1.bf16.msra.mxu0 0
    %612 = vmatprep.subr.bf16.mxu0 0
    %613 = vmatpush1.bf16.msra.mxu0 0
    %614 = vmatprep.subr.bf16.mxu0 0
    %615 = vmatpush1.bf16.msra.mxu0 0
    %616 = vmatprep.subr.bf16.mxu0 0
    %617 = vmatpush1.bf16.msra.mxu0 0
    %618 = vmatprep.subr.bf16.mxu0 0
    %619 = vmatpush1.bf16.msra.mxu0 0
    %620 = vmatprep.subr.bf16.mxu0 0
    %621 = vmatpush1.bf16.msra.mxu0 0
    %622 = vmatprep.subr.bf16.mxu0 0
    %623 = vmatpush1.bf16.msra.mxu0 0
    %624 = vmatprep.subr.bf16.mxu0 0
    %625 = vmatpush1.bf16.msra.mxu0 0
    %626 = vmatprep.mubr.bf16.mxu0 0
    %627 = vmatmul.mubr.bf16.gmra.mrb[0].mxu0 %v588
    %v628 = vpop.f32.mrb[0].mxu0
    %v629 = vadd.f32 %v584, %v628
    %v630 = vpop.f32.mrb[0].mxu0
    %v631 = vpop.f32.mrb[0].mxu0
    %v632 = vadd.f32 %v584, %v631
    %v633 = vpop.f32.mrb[0].mxu0
    %634 = vdwg.mxu0
    %v635 = vmul.f32 %v629, %v457
    %v636 = vmul.f32 %v632, %v458
    %v637 = vadd.f32 %v635, %v438
    %v638 = vadd.f32 %v636, %v444
    %v639 = vtanh.pop %v637
    %v640 = vtanh.pop %v638
    %v641 = vmul.f32 %v639, %v639
    %v642 = vmul.f32 %v640, %v640
    %v643 = vsub.f32 1.0, %v641
    %v644 = vsub.f32 1.0, %v642
    %v645 = vmul.f32 %v457, %v643
    %v646 = vmul.f32 %v458, %v644
    %v647 = vmul.f32 %v387, %v645
    %v648 = vmul.f32 %v387, %v646
    %v649 = vmul.f32 %v391, %v645
    %v650 = vmul.f32 %v391, %v646
    %v651 = vmul.f32 %v395, %v645
    %v652 = vmul.f32 %v395, %v646
    %v653 = vmul.f32 %v399, %v645
    %v654 = vmul.f32 %v399, %v646
    %v655 = vpack.c.bf16 %v640, %v639
    %v657 = vlaneseq
    %v658 = vshrl.u32 %v657, 7
    %v659 = vsub.s32 0, %v658
    %v660 = vrot.slane %v352, %v659
    %vm662 = vcmask 261120
    %v664 = vsel %vm662, %v655, 0
    %666 = vmatprep.subr.bf16.mxu0 0
    %667 = vmatpush1.bf16.msra.mxu0 %v355
    %668 = vmatprep.subr.bf16.mxu0 0
    %669 = vmatpush1.bf16.msra.mxu0 %v356
    %670 = vmatprep.subr.bf16.mxu0 0
    %671 = vmatpush1.bf16.msra.mxu0 0
    %672 = vmatprep.subr.bf16.mxu0 0
    %673 = vmatpush1.bf16.msra.mxu0 0
    %674 = vmatprep.subr.bf16.mxu0 0
    %675 = vmatpush1.bf16.msra.mxu0 0
    %676 = vmatprep.subr.bf16.mxu0 0
    %677 = vmatpush1.bf16.msra.mxu0 0
    %678 = vmatprep.subr.bf16.mxu0 0
    %679 = vmatpush1.bf16.msra.mxu0 0
    %680 = vmatprep.subr.bf16.mxu0 0
    %681 = vmatpush1.bf16.msra.mxu0 0
    %682 = vmatprep.subr.bf16.mxu0 0
    %683 = vmatpush1.bf16.msra.mxu0 0
    %684 = vmatprep.subr.bf16.mxu0 0
    %685 = vmatpush1.bf16.msra.mxu0 0
    %686 = vmatprep.subr.bf16.mxu0 0
    %687 = vmatpush1.bf16.msra.mxu0 0
    %688 = vmatprep.subr.bf16.mxu0 0
    %689 = vmatpush1.bf16.msra.mxu0 0
    %690 = vmatprep.subr.bf16.mxu0 0
    %691 = vmatpush1.bf16.msra.mxu0 0
    %692 = vmatprep.subr.bf16.mxu0 0
    %693 = vmatpush1.bf16.msra.mxu0 0
    %694 = vmatprep.subr.bf16.mxu0 0
    %695 = vmatpush1.bf16.msra.mxu0 0
    %696 = vmatprep.subr.bf16.mxu0 0
    %697 = vmatpush1.bf16.msra.mxu0 0
    %698 = vmatprep.mubr.bf16.mxu0 0
    %699 = vmatmul.mubr.bf16.gmra.mrb[0].mxu0 %v664
    %v700 = vpop.f32.mrb[0].mxu0
    %v701 = vadd.f32 %v660, %v700
    %v702 = vpop.f32.mrb[0].mxu0
    %v703 = vpop.f32.mrb[0].mxu0
    %v704 = vadd.f32 %v660, %v703
    %v705 = vpop.f32.mrb[0].mxu0
    %706 = vdwg.mxu0
    %v707 = vmul.f32 %v701, %v467
    %v708 = vmul.f32 %v704, %v468
    %v709 = vadd.f32 %v707, %v440
    %v710 = vadd.f32 %v708, %v446
    %v711 = vtanh.pop %v709
    %v712 = vtanh.pop %v710
    %v713 = vmul.f32 %v711, %v711
    %v714 = vmul.f32 %v712, %v712
    %v715 = vsub.f32 1.0, %v713
    %v716 = vsub.f32 1.0, %v714
    %v717 = vmul.f32 %v467, %v715
    %v718 = vmul.f32 %v468, %v716
    %v719 = vpack.c.bf16 %v648, %v647
    %v720 = vpack.c.bf16 %v650, %v649
    %v721 = vpack.c.bf16 %v652, %v651
    %v722 = vpack.c.bf16 %v654, %v653
    %v724 = vsel %vm662, %v719, 0
    %v727 = vsel %vm662, %v720, 0
    %v730 = vsel %vm662, %v721, 0
    %v733 = vsel %vm662, %v722, 0
    %735 = vmatprep.subr.bf16.mxu0 0
    %736 = vmatpush1.bf16.msra.mxu0 %v355
    %737 = vmatprep.subr.bf16.mxu0 0
    %738 = vmatpush1.bf16.msra.mxu0 %v356
    %739 = vmatprep.subr.bf16.mxu0 0
    %740 = vmatpush1.bf16.msra.mxu0 0
    %741 = vmatprep.subr.bf16.mxu0 0
    %742 = vmatpush1.bf16.msra.mxu0 0
    %743 = vmatprep.subr.bf16.mxu0 0
    %744 = vmatpush1.bf16.msra.mxu0 0
    %745 = vmatprep.subr.bf16.mxu0 0
    %746 = vmatpush1.bf16.msra.mxu0 0
    %747 = vmatprep.subr.bf16.mxu0 0
    %748 = vmatpush1.bf16.msra.mxu0 0
    %749 = vmatprep.subr.bf16.mxu0 0
    %750 = vmatpush1.bf16.msra.mxu0 0
    %751 = vmatprep.subr.bf16.mxu0 0
    %752 = vmatpush1.bf16.msra.mxu0 0
    %753 = vmatprep.subr.bf16.mxu0 0
    %754 = vmatpush1.bf16.msra.mxu0 0
    %755 = vmatprep.subr.bf16.mxu0 0
    %756 = vmatpush1.bf16.msra.mxu0 0
    %757 = vmatprep.subr.bf16.mxu0 0
    %758 = vmatpush1.bf16.msra.mxu0 0
    %759 = vmatprep.subr.bf16.mxu0 0
    %760 = vmatpush1.bf16.msra.mxu0 0
    %761 = vmatprep.subr.bf16.mxu0 0
    %762 = vmatpush1.bf16.msra.mxu0 0
    %763 = vmatprep.subr.bf16.mxu0 0
    %764 = vmatpush1.bf16.msra.mxu0 0
    %765 = vmatprep.subr.bf16.mxu0 0
    %766 = vmatpush1.bf16.msra.mxu0 0
    %767 = vmatprep.mubr.bf16.mxu0 0
    %768 = vmatmul.mubr.bf16.gmra.mrb[0].mxu0 %v724
    %v769 = vpop.f32.mrb[0].mxu0
    %v770 = vadd.f32 0.0, %v769
    %v771 = vpop.f32.mrb[0].mxu0
    %v772 = vpop.f32.mrb[0].mxu0
    %v773 = vadd.f32 0.0, %v772
    %v774 = vpop.f32.mrb[0].mxu0
    %775 = vmatprep.mubr.bf16.mxu0 0
    %776 = vmatmul.mubr.bf16.gmra.mrb[0].mxu0 %v727
    %v777 = vpop.f32.mrb[0].mxu0
    %v778 = vadd.f32 0.0, %v777
    %v779 = vpop.f32.mrb[0].mxu0
    %v780 = vpop.f32.mrb[0].mxu0
    %v781 = vadd.f32 0.0, %v780
    %v782 = vpop.f32.mrb[0].mxu0
    %783 = vmatprep.mubr.bf16.mxu0 0
    %784 = vmatmul.mubr.bf16.gmra.mrb[0].mxu0 %v730
    %v785 = vpop.f32.mrb[0].mxu0
    %v786 = vadd.f32 0.0, %v785
    %v787 = vpop.f32.mrb[0].mxu0
    %v788 = vpop.f32.mrb[0].mxu0
    %v789 = vadd.f32 0.0, %v788
    %v790 = vpop.f32.mrb[0].mxu0
    %791 = vmatprep.mubr.bf16.mxu0 0
    %792 = vmatmul.mubr.bf16.gmra.mrb[0].mxu0 %v733
    %v793 = vpop.f32.mrb[0].mxu0
    %v794 = vadd.f32 0.0, %v793
    %v795 = vpop.f32.mrb[0].mxu0
    %v796 = vpop.f32.mrb[0].mxu0
    %v797 = vadd.f32 0.0, %v796
    %v798 = vpop.f32.mrb[0].mxu0
    %799 = vdwg.mxu0
    %v800 = vmul.f32 %v770, %v717
    %v801 = vmul.f32 %v773, %v718
    %v802 = vmul.f32 %v778, %v717
    %v803 = vmul.f32 %v781, %v718
    %v804 = vmul.f32 %v786, %v717
    %v805 = vmul.f32 %v789, %v718
    %v806 = vmul.f32 %v794, %v717
    %v807 = vmul.f32 %v797, %v718
    %v808 = vpack.c.bf16 %v712, %v711
    %v810 = vlaneseq
    %v811 = vshrl.u32 %v810, 7
    %v812 = vsub.s32 0, %v811
    %v813 = vrot.slane %v353, %v812
    %v816 = vsel %vm662, %v808, 0
    %818 = vmatprep.subr.bf16.mxu0 0
    %819 = vmatpush1.bf16.msra.mxu0 %v357
    %820 = vmatprep.subr.bf16.mxu0 0
    %821 = vmatpush1.bf16.msra.mxu0 %v358
    %822 = vmatprep.subr.bf16.mxu0 0
    %823 = vmatpush1.bf16.msra.mxu0 0
    %824 = vmatprep.subr.bf16.mxu0 0
    %825 = vmatpush1.bf16.msra.mxu0 0
    %826 = vmatprep.subr.bf16.mxu0 0
    %827 = vmatpush1.bf16.msra.mxu0 0
    %828 = vmatprep.subr.bf16.mxu0 0
    %829 = vmatpush1.bf16.msra.mxu0 0
    %830 = vmatprep.subr.bf16.mxu0 0
    %831 = vmatpush1.bf16.msra.mxu0 0
    %832 = vmatprep.subr.bf16.mxu0 0
    %833 = vmatpush1.bf16.msra.mxu0 0
    %834 = vmatprep.subr.bf16.mxu0 0
    %835 = vmatpush1.bf16.msra.mxu0 0
    %836 = vmatprep.subr.bf16.mxu0 0
    %837 = vmatpush1.bf16.msra.mxu0 0
    %838 = vmatprep.subr.bf16.mxu0 0
    %839 = vmatpush1.bf16.msra.mxu0 0
    %840 = vmatprep.subr.bf16.mxu0 0
    %841 = vmatpush1.bf16.msra.mxu0 0
    %842 = vmatprep.subr.bf16.mxu0 0
    %843 = vmatpush1.bf16.msra.mxu0 0
    %844 = vmatprep.subr.bf16.mxu0 0
    %845 = vmatpush1.bf16.msra.mxu0 0
    %846 = vmatprep.subr.bf16.mxu0 0
    %847 = vmatpush1.bf16.msra.mxu0 0
    %848 = vmatprep.subr.bf16.mxu0 0
    %849 = vmatpush1.bf16.msra.mxu0 0
    %850 = vmatprep.mubr.bf16.mxu0 0
    %851 = vmatmul.mubr.bf16.gmra.mrb[0].mxu0 %v816
    %v852 = vpop.f32.mrb[0].mxu0
    %v853 = vadd.f32 %v813, %v852
    %v854 = vpop.f32.mrb[0].mxu0
    %v855 = vpop.f32.mrb[0].mxu0
    %v856 = vadd.f32 %v813, %v855
    %v857 = vpop.f32.mrb[0].mxu0
    %858 = vdwg.mxu0
    %v859 = vmul.f32 %v853, %v477
    %v860 = vmul.f32 %v856, %v478
    %v861 = vadd.f32 %v859, %v442
    %v862 = vadd.f32 %v860, %v448
    %v863 = vpack.c.bf16 %v801, %v800
    %v864 = vpack.c.bf16 %v803, %v802
    %v865 = vpack.c.bf16 %v805, %v804
    %v866 = vpack.c.bf16 %v807, %v806
    %v868 = vsel %vm662, %v863, 0
    %v871 = vsel %vm662, %v864, 0
    %v874 = vsel %vm662, %v865, 0
    %v877 = vsel %vm662, %v866, 0
    %879 = vmatprep.subr.bf16.mxu0 0
    %880 = vmatpush1.bf16.msra.mxu0 %v357
    %881 = vmatprep.subr.bf16.mxu0 0
    %882 = vmatpush1.bf16.msra.mxu0 %v358
    %883 = vmatprep.subr.bf16.mxu0 0
    %884 = vmatpush1.bf16.msra.mxu0 0
    %885 = vmatprep.subr.bf16.mxu0 0
    %886 = vmatpush1.bf16.msra.mxu0 0
    %887 = vmatprep.subr.bf16.mxu0 0
    %888 = vmatpush1.bf16.msra.mxu0 0
    %889 = vmatprep.subr.bf16.mxu0 0
    %890 = vmatpush1.bf16.msra.mxu0 0
    %891 = vmatprep.subr.bf16.mxu0 0
    %892 = vmatpush1.bf16.msra.mxu0 0
    %893 = vmatprep.subr.bf16.mxu0 0
    %894 = vmatpush1.bf16.msra.mxu0 0
    %895 = vmatprep.subr.bf16.mxu0 0
    %896 = vmatpush1.bf16.msra.mxu0 0
    %897 = vmatprep.subr.bf16.mxu0 0
    %898 = vmatpush1.bf16.msra.mxu0 0
    %899 = vmatprep.subr.bf16.mxu0 0
    %900 = vmatpush1.bf16.msra.mxu0 0
    %901 = vmatprep.subr.bf16.mxu0 0
    %902 = vmatpush1.bf16.msra.mxu0 0
    %903 = vmatprep.subr.bf16.mxu0 0
    %904 = vmatpush1.bf16.msra.mxu0 0
    %905 = vmatprep.subr.bf16.mxu0 0
    %906 = vmatpush1.bf16.msra.mxu0 0
    %907 = vmatprep.subr.bf16.mxu0 0
    %908 = vmatpush1.bf16.msra.mxu0 0
    %909 = vmatprep.subr.bf16.mxu0 0
    %910 = vmatpush1.bf16.msra.mxu0 0
    %911 = vmatprep.mubr.bf16.mxu0 0
    %912 = vmatmul.mubr.bf16.gmra.mrb[0].mxu0 %v868
    %v913 = vpop.f32.mrb[0].mxu0
    %v914 = vadd.f32 0.0, %v913
    %v915 = vpop.f32.mrb[0].mxu0
    %v916 = vpop.f32.mrb[0].mxu0
    %v917 = vadd.f32 0.0, %v916
    %v918 = vpop.f32.mrb[0].mxu0
    %919 = vmatprep.mubr.bf16.mxu0 0
    %920 = vmatmul.mubr.bf16.gmra.mrb[0].mxu0 %v871
    %v921 = vpop.f32.mrb[0].mxu0
    %v922 = vadd.f32 0.0, %v921
    %v923 = vpop.f32.mrb[0].mxu0
    %v924 = vpop.f32.mrb[0].mxu0
    %v925 = vadd.f32 0.0, %v924
    %v926 = vpop.f32.mrb[0].mxu0
    %927 = vmatprep.mubr.bf16.mxu0 0
    %928 = vmatmul.mubr.bf16.gmra.mrb[0].mxu0 %v874
    %v929 = vpop.f32.mrb[0].mxu0
    %v930 = vadd.f32 0.0, %v929
    %v931 = vpop.f32.mrb[0].mxu0
    %v932 = vpop.f32.mrb[0].mxu0
    %v933 = vadd.f32 0.0, %v932
    %v934 = vpop.f32.mrb[0].mxu0
    %935 = vmatprep.mubr.bf16.mxu0 0
    %936 = vmatmul.mubr.bf16.gmra.mrb[0].mxu0 %v877
    %v937 = vpop.f32.mrb[0].mxu0
    %v938 = vadd.f32 0.0, %v937
    %v939 = vpop.f32.mrb[0].mxu0
    %v940 = vpop.f32.mrb[0].mxu0
    %v941 = vadd.f32 0.0, %v940
    %v942 = vpop.f32.mrb[0].mxu0
    %943 = vdwg.mxu0
    %v944 = vmul.f32 %v914, %v477
    %v945 = vmul.f32 %v917, %v478
    %v946 = vmul.f32 %v922, %v477
    %v947 = vmul.f32 %v925, %v478
    %v948 = vmul.f32 %v930, %v477
    %v949 = vmul.f32 %v933, %v478
    %v950 = vmul.f32 %v938, %v477
    %v951 = vmul.f32 %v941, %v478
    %v952 = vmul.f32 %v944, %v414
    %v953 = vmul.f32 %v945, %v414
    %v954 = vmul.f32 %v946, %v415
    %v955 = vmul.f32 %v947, %v415
    %v956 = vmul.f32 %v948, %v416
    %v957 = vmul.f32 %v949, %v416
    %v958 = vmul.f32 %v950, %v417
    %v959 = vmul.f32 %v951, %v417
    %v960 = vsel %vm586, %v952, 0.0
    %v961 = vsel %vm586, %v954, 0.0
    %v962 = vadd.f32 %v960, %v961
    %v963 = vsel %vm586, %v956, 0.0
    %v964 = vadd.f32 %v962, %v963
    %v965 = vsel %vm586, %v958, 0.0
    %v966 = vadd.f32 %v964, %v965
    %v967 = vsel %vm586, %v953, 0.0
    %v968 = vsel %vm586, %v955, 0.0
    %v969 = vadd.f32 %v967, %v968
    %v970 = vsel %vm586, %v957, 0.0
    %v971 = vadd.f32 %v969, %v970
    %v972 = vsel %vm586, %v959, 0.0
    %v973 = vadd.f32 %v971, %v972
    %v974 = vsel %vm586, %v966, 0.0
    %975 = vadd.xlane.f32.xlu0 %v974
    %v976 = vpop.xlane.xlu0 %975
    %v977 = vsel %vm586, %v973, 0.0
    %978 = vadd.xlane.f32.xlu0 %v977
    %v979 = vpop.xlane.xlu0 %978
    %v980 = vmul.f32 %v861, 0.0625
    %v981 = vmul.f32 %v862, 0.0625
    %v982 = vadd.f32 %v424, %v980
    %v983 = vadd.f32 %v425, %v981
    %v984 = vpack.c.bf16 %v983, %v982
    %v986 = vsel %vm586, %v984, 0
    %988 = vmatprep.subr.bf16.mxu0 0
    %989 = vmatpush1.bf16.msra.mxu0 %v592
    %990 = vmatprep.subr.bf16.mxu0 0
    %991 = vmatpush1.bf16.msra.mxu0 0
    %992 = vmatprep.subr.bf16.mxu0 0
    %993 = vmatpush1.bf16.msra.mxu0 0
    %994 = vmatprep.subr.bf16.mxu0 0
    %995 = vmatpush1.bf16.msra.mxu0 0
    %996 = vmatprep.subr.bf16.mxu0 0
    %997 = vmatpush1.bf16.msra.mxu0 0
    %998 = vmatprep.subr.bf16.mxu0 0
    %999 = vmatpush1.bf16.msra.mxu0 0
    %1000 = vmatprep.subr.bf16.mxu0 0
    %1001 = vmatpush1.bf16.msra.mxu0 0
    %1002 = vmatprep.subr.bf16.mxu0 0
    %1003 = vmatpush1.bf16.msra.mxu0 0
    %1004 = vmatprep.subr.bf16.mxu0 0
    %1005 = vmatpush1.bf16.msra.mxu0 0
    %1006 = vmatprep.subr.bf16.mxu0 0
    %1007 = vmatpush1.bf16.msra.mxu0 0
    %1008 = vmatprep.subr.bf16.mxu0 0
    %1009 = vmatpush1.bf16.msra.mxu0 0
    %1010 = vmatprep.subr.bf16.mxu0 0
    %1011 = vmatpush1.bf16.msra.mxu0 0
    %1012 = vmatprep.subr.bf16.mxu0 0
    %1013 = vmatpush1.bf16.msra.mxu0 0
    %1014 = vmatprep.subr.bf16.mxu0 0
    %1015 = vmatpush1.bf16.msra.mxu0 0
    %1016 = vmatprep.subr.bf16.mxu0 0
    %1017 = vmatpush1.bf16.msra.mxu0 0
    %1018 = vmatprep.subr.bf16.mxu0 0
    %1019 = vmatpush1.bf16.msra.mxu0 0
    %1020 = vmatprep.mubr.bf16.mxu0 0
    %1021 = vmatmul.mubr.bf16.gmra.mrb[0].mxu0 %v986
    %v1022 = vpop.f32.mrb[0].mxu0
    %v1023 = vadd.f32 %v584, %v1022
    %v1024 = vpop.f32.mrb[0].mxu0
    %v1025 = vpop.f32.mrb[0].mxu0
    %v1026 = vadd.f32 %v584, %v1025
    %v1027 = vpop.f32.mrb[0].mxu0
    %1028 = vdwg.mxu0
    %v1029 = vmul.f32 %v1023, %v507
    %v1030 = vmul.f32 %v1026, %v508
    %v1031 = vadd.f32 %v1029, %v488
    %v1032 = vadd.f32 %v1030, %v494
    %v1033 = vtanh.pop %v1031
    %v1034 = vtanh.pop %v1032
    %v1035 = vmul.f32 %v1033, %v1033
    %v1036 = vmul.f32 %v1034, %v1034
    %v1037 = vsub.f32 1.0, %v1035
    %v1038 = vsub.f32 1.0, %v1036
    %v1039 = vmul.f32 %v507, %v1037
    %v1040 = vmul.f32 %v508, %v1038
    %v1041 = vmul.f32 %v387, %v1039
    %v1042 = vmul.f32 %v387, %v1040
    %v1043 = vmul.f32 %v391, %v1039
    %v1044 = vmul.f32 %v391, %v1040
    %v1045 = vmul.f32 %v395, %v1039
    %v1046 = vmul.f32 %v395, %v1040
    %v1047 = vmul.f32 %v399, %v1039
    %v1048 = vmul.f32 %v399, %v1040
    %v1049 = vpack.c.bf16 %v1034, %v1033
    %v1051 = vsel %vm662, %v1049, 0
    %1053 = vmatprep.subr.bf16.mxu0 0
    %1054 = vmatpush1.bf16.msra.mxu0 %v355
    %1055 = vmatprep.subr.bf16.mxu0 0
    %1056 = vmatpush1.bf16.msra.mxu0 %v356
    %1057 = vmatprep.subr.bf16.mxu0 0
    %1058 = vmatpush1.bf16.msra.mxu0 0
    %1059 = vmatprep.subr.bf16.mxu0 0
    %1060 = vmatpush1.bf16.msra.mxu0 0
    %1061 = vmatprep.subr.bf16.mxu0 0
    %1062 = vmatpush1.bf16.msra.mxu0 0
    %1063 = vmatprep.subr.bf16.mxu0 0
    %1064 = vmatpush1.bf16.msra.mxu0 0
    %1065 = vmatprep.subr.bf16.mxu0 0
    %1066 = vmatpush1.bf16.msra.mxu0 0
    %1067 = vmatprep.subr.bf16.mxu0 0
    %1068 = vmatpush1.bf16.msra.mxu0 0
    %1069 = vmatprep.subr.bf16.mxu0 0
    %1070 = vmatpush1.bf16.msra.mxu0 0
    %1071 = vmatprep.subr.bf16.mxu0 0
    %1072 = vmatpush1.bf16.msra.mxu0 0
    %1073 = vmatprep.subr.bf16.mxu0 0
    %1074 = vmatpush1.bf16.msra.mxu0 0
    %1075 = vmatprep.subr.bf16.mxu0 0
    %1076 = vmatpush1.bf16.msra.mxu0 0
    %1077 = vmatprep.subr.bf16.mxu0 0
    %1078 = vmatpush1.bf16.msra.mxu0 0
    %1079 = vmatprep.subr.bf16.mxu0 0
    %1080 = vmatpush1.bf16.msra.mxu0 0
    %1081 = vmatprep.subr.bf16.mxu0 0
    %1082 = vmatpush1.bf16.msra.mxu0 0
    %1083 = vmatprep.subr.bf16.mxu0 0
    %1084 = vmatpush1.bf16.msra.mxu0 0
    %1085 = vmatprep.mubr.bf16.mxu0 0
    %1086 = vmatmul.mubr.bf16.gmra.mrb[0].mxu0 %v1051
    %v1087 = vpop.f32.mrb[0].mxu0
    %v1088 = vadd.f32 %v660, %v1087
    %v1089 = vpop.f32.mrb[0].mxu0
    %v1090 = vpop.f32.mrb[0].mxu0
    %v1091 = vadd.f32 %v660, %v1090
    %v1092 = vpop.f32.mrb[0].mxu0
    %1093 = vdwg.mxu0
    %v1094 = vmul.f32 %v1088, %v517
    %v1095 = vmul.f32 %v1091, %v518
    %v1096 = vadd.f32 %v1094, %v490
    %v1097 = vadd.f32 %v1095, %v496
    %v1098 = vtanh.pop %v1096
    %v1099 = vtanh.pop %v1097
    %v1100 = vmul.f32 %v1098, %v1098
    %v1101 = vmul.f32 %v1099, %v1099
    %v1102 = vsub.f32 1.0, %v1100
    %v1103 = vsub.f32 1.0, %v1101
    %v1104 = vmul.f32 %v517, %v1102
    %v1105 = vmul.f32 %v518, %v1103
    %v1106 = vpack.c.bf16 %v1042, %v1041
    %v1107 = vpack.c.bf16 %v1044, %v1043
    %v1108 = vpack.c.bf16 %v1046, %v1045
    %v1109 = vpack.c.bf16 %v1048, %v1047
    %v1111 = vsel %vm662, %v1106, 0
    %v1114 = vsel %vm662, %v1107, 0
    %v1117 = vsel %vm662, %v1108, 0
    %v1120 = vsel %vm662, %v1109, 0
    %1122 = vmatprep.subr.bf16.mxu0 0
    %1123 = vmatpush1.bf16.msra.mxu0 %v355
    %1124 = vmatprep.subr.bf16.mxu0 0
    %1125 = vmatpush1.bf16.msra.mxu0 %v356
    %1126 = vmatprep.subr.bf16.mxu0 0
    %1127 = vmatpush1.bf16.msra.mxu0 0
    %1128 = vmatprep.subr.bf16.mxu0 0
    %1129 = vmatpush1.bf16.msra.mxu0 0
    %1130 = vmatprep.subr.bf16.mxu0 0
    %1131 = vmatpush1.bf16.msra.mxu0 0
    %1132 = vmatprep.subr.bf16.mxu0 0
    %1133 = vmatpush1.bf16.msra.mxu0 0
    %1134 = vmatprep.subr.bf16.mxu0 0
    %1135 = vmatpush1.bf16.msra.mxu0 0
    %1136 = vmatprep.subr.bf16.mxu0 0
    %1137 = vmatpush1.bf16.msra.mxu0 0
    %1138 = vmatprep.subr.bf16.mxu0 0
    %1139 = vmatpush1.bf16.msra.mxu0 0
    %1140 = vmatprep.subr.bf16.mxu0 0
    %1141 = vmatpush1.bf16.msra.mxu0 0
    %1142 = vmatprep.subr.bf16.mxu0 0
    %1143 = vmatpush1.bf16.msra.mxu0 0
    %1144 = vmatprep.subr.bf16.mxu0 0
    %1145 = vmatpush1.bf16.msra.mxu0 0
    %1146 = vmatprep.subr.bf16.mxu0 0
    %1147 = vmatpush1.bf16.msra.mxu0 0
    %1148 = vmatprep.subr.bf16.mxu0 0
    %1149 = vmatpush1.bf16.msra.mxu0 0
    %1150 = vmatprep.subr.bf16.mxu0 0
    %1151 = vmatpush1.bf16.msra.mxu0 0
    %1152 = vmatprep.subr.bf16.mxu0 0
    %1153 = vmatpush1.bf16.msra.mxu0 0
    %1154 = vmatprep.mubr.bf16.mxu0 0
    %1155 = vmatmul.mubr.bf16.gmra.mrb[0].mxu0 %v1111
    %v1156 = vpop.f32.mrb[0].mxu0
    %v1157 = vadd.f32 0.0, %v1156
    %v1158 = vpop.f32.mrb[0].mxu0
    %v1159 = vpop.f32.mrb[0].mxu0
    %v1160 = vadd.f32 0.0, %v1159
    %v1161 = vpop.f32.mrb[0].mxu0
    %1162 = vmatprep.mubr.bf16.mxu0 0
    %1163 = vmatmul.mubr.bf16.gmra.mrb[0].mxu0 %v1114
    %v1164 = vpop.f32.mrb[0].mxu0
    %v1165 = vadd.f32 0.0, %v1164
    %v1166 = vpop.f32.mrb[0].mxu0
    %v1167 = vpop.f32.mrb[0].mxu0
    %v1168 = vadd.f32 0.0, %v1167
    %v1169 = vpop.f32.mrb[0].mxu0
    %1170 = vmatprep.mubr.bf16.mxu0 0
    %1171 = vmatmul.mubr.bf16.gmra.mrb[0].mxu0 %v1117
    %v1172 = vpop.f32.mrb[0].mxu0
    %v1173 = vadd.f32 0.0, %v1172
    %v1174 = vpop.f32.mrb[0].mxu0
    %v1175 = vpop.f32.mrb[0].mxu0
    %v1176 = vadd.f32 0.0, %v1175
    %v1177 = vpop.f32.mrb[0].mxu0
    %1178 = vmatprep.mubr.bf16.mxu0 0
    %1179 = vmatmul.mubr.bf16.gmra.mrb[0].mxu0 %v1120
    %v1180 = vpop.f32.mrb[0].mxu0
    %v1181 = vadd.f32 0.0, %v1180
    %v1182 = vpop.f32.mrb[0].mxu0
    %v1183 = vpop.f32.mrb[0].mxu0
    %v1184 = vadd.f32 0.0, %v1183
    %v1185 = vpop.f32.mrb[0].mxu0
    %1186 = vdwg.mxu0
    %v1187 = vmul.f32 %v1157, %v1104
    %v1188 = vmul.f32 %v1160, %v1105
    %v1189 = vmul.f32 %v1165, %v1104
    %v1190 = vmul.f32 %v1168, %v1105
    %v1191 = vmul.f32 %v1173, %v1104
    %v1192 = vmul.f32 %v1176, %v1105
    %v1193 = vmul.f32 %v1181, %v1104
    %v1194 = vmul.f32 %v1184, %v1105
    %v1195 = vpack.c.bf16 %v1099, %v1098
    %v1197 = vsel %vm662, %v1195, 0
    %1199 = vmatprep.subr.bf16.mxu0 0
    %1200 = vmatpush1.bf16.msra.mxu0 %v357
    %1201 = vmatprep.subr.bf16.mxu0 0
    %1202 = vmatpush1.bf16.msra.mxu0 %v358
    %1203 = vmatprep.subr.bf16.mxu0 0
    %1204 = vmatpush1.bf16.msra.mxu0 0
    %1205 = vmatprep.subr.bf16.mxu0 0
    %1206 = vmatpush1.bf16.msra.mxu0 0
    %1207 = vmatprep.subr.bf16.mxu0 0
    %1208 = vmatpush1.bf16.msra.mxu0 0
    %1209 = vmatprep.subr.bf16.mxu0 0
    %1210 = vmatpush1.bf16.msra.mxu0 0
    %1211 = vmatprep.subr.bf16.mxu0 0
    %1212 = vmatpush1.bf16.msra.mxu0 0
    %1213 = vmatprep.subr.bf16.mxu0 0
    %1214 = vmatpush1.bf16.msra.mxu0 0
    %1215 = vmatprep.subr.bf16.mxu0 0
    %1216 = vmatpush1.bf16.msra.mxu0 0
    %1217 = vmatprep.subr.bf16.mxu0 0
    %1218 = vmatpush1.bf16.msra.mxu0 0
    %1219 = vmatprep.subr.bf16.mxu0 0
    %1220 = vmatpush1.bf16.msra.mxu0 0
    %1221 = vmatprep.subr.bf16.mxu0 0
    %1222 = vmatpush1.bf16.msra.mxu0 0
    %1223 = vmatprep.subr.bf16.mxu0 0
    %1224 = vmatpush1.bf16.msra.mxu0 0
    %1225 = vmatprep.subr.bf16.mxu0 0
    %1226 = vmatpush1.bf16.msra.mxu0 0
    %1227 = vmatprep.subr.bf16.mxu0 0
    %1228 = vmatpush1.bf16.msra.mxu0 0
    %1229 = vmatprep.subr.bf16.mxu0 0
    %1230 = vmatpush1.bf16.msra.mxu0 0
    %1231 = vmatprep.mubr.bf16.mxu0 0
    %1232 = vmatmul.mubr.bf16.gmra.mrb[0].mxu0 %v1197
    %v1233 = vpop.f32.mrb[0].mxu0
    %v1234 = vadd.f32 %v813, %v1233
    %v1235 = vpop.f32.mrb[0].mxu0
    %v1236 = vpop.f32.mrb[0].mxu0
    %v1237 = vadd.f32 %v813, %v1236
    %v1238 = vpop.f32.mrb[0].mxu0
    %1239 = vdwg.mxu0
    %v1240 = vmul.f32 %v1234, %v527
    %v1241 = vmul.f32 %v1237, %v528
    %v1242 = vadd.f32 %v1240, %v492
    %v1243 = vadd.f32 %v1241, %v498
    %v1244 = vpack.c.bf16 %v1188, %v1187
    %v1245 = vpack.c.bf16 %v1190, %v1189
    %v1246 = vpack.c.bf16 %v1192, %v1191
    %v1247 = vpack.c.bf16 %v1194, %v1193
    %v1249 = vsel %vm662, %v1244, 0
    %v1252 = vsel %vm662, %v1245, 0
    %v1255 = vsel %vm662, %v1246, 0
    %v1258 = vsel %vm662, %v1247, 0
    %1260 = vmatprep.subr.bf16.mxu0 0
    %1261 = vmatpush1.bf16.msra.mxu0 %v357
    %1262 = vmatprep.subr.bf16.mxu0 0
    %1263 = vmatpush1.bf16.msra.mxu0 %v358
    %1264 = vmatprep.subr.bf16.mxu0 0
    %1265 = vmatpush1.bf16.msra.mxu0 0
    %1266 = vmatprep.subr.bf16.mxu0 0
    %1267 = vmatpush1.bf16.msra.mxu0 0
    %1268 = vmatprep.subr.bf16.mxu0 0
    %1269 = vmatpush1.bf16.msra.mxu0 0
    %1270 = vmatprep.subr.bf16.mxu0 0
    %1271 = vmatpush1.bf16.msra.mxu0 0
    %1272 = vmatprep.subr.bf16.mxu0 0
    %1273 = vmatpush1.bf16.msra.mxu0 0
    %1274 = vmatprep.subr.bf16.mxu0 0
    %1275 = vmatpush1.bf16.msra.mxu0 0
    %1276 = vmatprep.subr.bf16.mxu0 0
    %1277 = vmatpush1.bf16.msra.mxu0 0
    %1278 = vmatprep.subr.bf16.mxu0 0
    %1279 = vmatpush1.bf16.msra.mxu0 0
    %1280 = vmatprep.subr.bf16.mxu0 0
    %1281 = vmatpush1.bf16.msra.mxu0 0
    %1282 = vmatprep.subr.bf16.mxu0 0
    %1283 = vmatpush1.bf16.msra.mxu0 0
    %1284 = vmatprep.subr.bf16.mxu0 0
    %1285 = vmatpush1.bf16.msra.mxu0 0
    %1286 = vmatprep.subr.bf16.mxu0 0
    %1287 = vmatpush1.bf16.msra.mxu0 0
    %1288 = vmatprep.subr.bf16.mxu0 0
    %1289 = vmatpush1.bf16.msra.mxu0 0
    %1290 = vmatprep.subr.bf16.mxu0 0
    %1291 = vmatpush1.bf16.msra.mxu0 0
    %1292 = vmatprep.mubr.bf16.mxu0 0
    %1293 = vmatmul.mubr.bf16.gmra.mrb[0].mxu0 %v1249
    %v1294 = vpop.f32.mrb[0].mxu0
    %v1295 = vadd.f32 0.0, %v1294
    %v1296 = vpop.f32.mrb[0].mxu0
    %v1297 = vpop.f32.mrb[0].mxu0
    %v1298 = vadd.f32 0.0, %v1297
    %v1299 = vpop.f32.mrb[0].mxu0
    %1300 = vmatprep.mubr.bf16.mxu0 0
    %1301 = vmatmul.mubr.bf16.gmra.mrb[0].mxu0 %v1252
    %v1302 = vpop.f32.mrb[0].mxu0
    %v1303 = vadd.f32 0.0, %v1302
    %v1304 = vpop.f32.mrb[0].mxu0
    %v1305 = vpop.f32.mrb[0].mxu0
    %v1306 = vadd.f32 0.0, %v1305
    %v1307 = vpop.f32.mrb[0].mxu0
    %1308 = vmatprep.mubr.bf16.mxu0 0
    %1309 = vmatmul.mubr.bf16.gmra.mrb[0].mxu0 %v1255
    %v1310 = vpop.f32.mrb[0].mxu0
    %v1311 = vadd.f32 0.0, %v1310
    %v1312 = vpop.f32.mrb[0].mxu0
    %v1313 = vpop.f32.mrb[0].mxu0
    %v1314 = vadd.f32 0.0, %v1313
    %v1315 = vpop.f32.mrb[0].mxu0
    %1316 = vmatprep.mubr.bf16.mxu0 0
    %1317 = vmatmul.mubr.bf16.gmra.mrb[0].mxu0 %v1258
    %v1318 = vpop.f32.mrb[0].mxu0
    %v1319 = vadd.f32 0.0, %v1318
    %v1320 = vpop.f32.mrb[0].mxu0
    %v1321 = vpop.f32.mrb[0].mxu0
    %v1322 = vadd.f32 0.0, %v1321
    %v1323 = vpop.f32.mrb[0].mxu0
    %1324 = vdwg.mxu0
    %v1325 = vmul.f32 %v1295, %v527
    %v1326 = vmul.f32 %v1298, %v528
    %v1327 = vmul.f32 %v1303, %v527
    %v1328 = vmul.f32 %v1306, %v528
    %v1329 = vmul.f32 %v1311, %v527
    %v1330 = vmul.f32 %v1314, %v528
    %v1331 = vmul.f32 %v1319, %v527
    %v1332 = vmul.f32 %v1322, %v528
    %v1333 = vmul.f32 %v1325, %v414
    %v1334 = vmul.f32 %v1326, %v414
    %v1335 = vmul.f32 %v1327, %v415
    %v1336 = vmul.f32 %v1328, %v415
    %v1337 = vmul.f32 %v1329, %v416
    %v1338 = vmul.f32 %v1330, %v416
    %v1339 = vmul.f32 %v1331, %v417
    %v1340 = vmul.f32 %v1332, %v417
    %v1341 = vsel %vm586, %v1333, 0.0
    %v1342 = vsel %vm586, %v1335, 0.0
    %v1343 = vadd.f32 %v1341, %v1342
    %v1344 = vsel %vm586, %v1337, 0.0
    %v1345 = vadd.f32 %v1343, %v1344
    %v1346 = vsel %vm586, %v1339, 0.0
    %v1347 = vadd.f32 %v1345, %v1346
    %v1348 = vsel %vm586, %v1334, 0.0
    %v1349 = vsel %vm586, %v1336, 0.0
    %v1350 = vadd.f32 %v1348, %v1349
    %v1351 = vsel %vm586, %v1338, 0.0
    %v1352 = vadd.f32 %v1350, %v1351
    %v1353 = vsel %vm586, %v1340, 0.0
    %v1354 = vadd.f32 %v1352, %v1353
    %v1355 = vsel %vm586, %v1347, 0.0
    %1356 = vadd.xlane.f32.xlu0 %v1355
    %v1357 = vpop.xlane.xlu0 %1356
    %v1358 = vsel %vm586, %v1354, 0.0
    %1359 = vadd.xlane.f32.xlu0 %v1358
    %v1360 = vpop.xlane.xlu0 %1359
    %v1361 = vmul.f32 %v1242, 0.0625
    %v1362 = vmul.f32 %v1243, 0.0625
    %v1363 = vadd.f32 %v424, %v1361
    %v1364 = vadd.f32 %v425, %v1362
    %v1365 = vpack.c.bf16 %v1364, %v1363
    %v1367 = vsel %vm586, %v1365, 0
    %1369 = vmatprep.subr.bf16.mxu0 0
    %1370 = vmatpush1.bf16.msra.mxu0 %v592
    %1371 = vmatprep.subr.bf16.mxu0 0
    %1372 = vmatpush1.bf16.msra.mxu0 0
    %1373 = vmatprep.subr.bf16.mxu0 0
    %1374 = vmatpush1.bf16.msra.mxu0 0
    %1375 = vmatprep.subr.bf16.mxu0 0
    %1376 = vmatpush1.bf16.msra.mxu0 0
    %1377 = vmatprep.subr.bf16.mxu0 0
    %1378 = vmatpush1.bf16.msra.mxu0 0
    %1379 = vmatprep.subr.bf16.mxu0 0
    %1380 = vmatpush1.bf16.msra.mxu0 0
    %1381 = vmatprep.subr.bf16.mxu0 0
    %1382 = vmatpush1.bf16.msra.mxu0 0
    %1383 = vmatprep.subr.bf16.mxu0 0
    %1384 = vmatpush1.bf16.msra.mxu0 0
    %1385 = vmatprep.subr.bf16.mxu0 0
    %1386 = vmatpush1.bf16.msra.mxu0 0
    %1387 = vmatprep.subr.bf16.mxu0 0
    %1388 = vmatpush1.bf16.msra.mxu0 0
    %1389 = vmatprep.subr.bf16.mxu0 0
    %1390 = vmatpush1.bf16.msra.mxu0 0
    %1391 = vmatprep.subr.bf16.mxu0 0
    %1392 = vmatpush1.bf16.msra.mxu0 0
    %1393 = vmatprep.subr.bf16.mxu0 0
    %1394 = vmatpush1.bf16.msra.mxu0 0
    %1395 = vmatprep.subr.bf16.mxu0 0
    %1396 = vmatpush1.bf16.msra.mxu0 0
    %1397 = vmatprep.subr.bf16.mxu0 0
    %1398 = vmatpush1.bf16.msra.mxu0 0
    %1399 = vmatprep.subr.bf16.mxu0 0
    %1400 = vmatpush1.bf16.msra.mxu0 0
    %1401 = vmatprep.mubr.bf16.mxu0 0
    %1402 = vmatmul.mubr.bf16.gmra.mrb[0].mxu0 %v1367
    %v1403 = vpop.f32.mrb[0].mxu0
    %v1404 = vadd.f32 %v584, %v1403
    %v1405 = vpop.f32.mrb[0].mxu0
    %v1406 = vpop.f32.mrb[0].mxu0
    %v1407 = vadd.f32 %v584, %v1406
    %v1408 = vpop.f32.mrb[0].mxu0
    %1409 = vdwg.mxu0
    %v1410 = vmul.f32 %v1404, %v507
    %v1411 = vmul.f32 %v1407, %v508
    %v1412 = vadd.f32 %v1410, %v488
    %v1413 = vadd.f32 %v1411, %v494
    %v1414 = vtanh.pop %v1412
    %v1415 = vtanh.pop %v1413
    %v1416 = vmul.f32 %v1414, %v1414
    %v1417 = vmul.f32 %v1415, %v1415
    %v1418 = vsub.f32 1.0, %v1416
    %v1419 = vsub.f32 1.0, %v1417
    %v1420 = vmul.f32 %v507, %v1418
    %v1421 = vmul.f32 %v508, %v1419
    %v1422 = vmul.f32 %v387, %v1420
    %v1423 = vmul.f32 %v387, %v1421
    %v1424 = vmul.f32 %v391, %v1420
    %v1425 = vmul.f32 %v391, %v1421
    %v1426 = vmul.f32 %v395, %v1420
    %v1427 = vmul.f32 %v395, %v1421
    %v1428 = vmul.f32 %v399, %v1420
    %v1429 = vmul.f32 %v399, %v1421
    %v1430 = vpack.c.bf16 %v1415, %v1414
    %v1432 = vsel %vm662, %v1430, 0
    %1434 = vmatprep.subr.bf16.mxu0 0
    %1435 = vmatpush1.bf16.msra.mxu0 %v355
    %1436 = vmatprep.subr.bf16.mxu0 0
    %1437 = vmatpush1.bf16.msra.mxu0 %v356
    %1438 = vmatprep.subr.bf16.mxu0 0
    %1439 = vmatpush1.bf16.msra.mxu0 0
    %1440 = vmatprep.subr.bf16.mxu0 0
    %1441 = vmatpush1.bf16.msra.mxu0 0
    %1442 = vmatprep.subr.bf16.mxu0 0
    %1443 = vmatpush1.bf16.msra.mxu0 0
    %1444 = vmatprep.subr.bf16.mxu0 0
    %1445 = vmatpush1.bf16.msra.mxu0 0
    %1446 = vmatprep.subr.bf16.mxu0 0
    %1447 = vmatpush1.bf16.msra.mxu0 0
    %1448 = vmatprep.subr.bf16.mxu0 0
    %1449 = vmatpush1.bf16.msra.mxu0 0
    %1450 = vmatprep.subr.bf16.mxu0 0
    %1451 = vmatpush1.bf16.msra.mxu0 0
    %1452 = vmatprep.subr.bf16.mxu0 0
    %1453 = vmatpush1.bf16.msra.mxu0 0
    %1454 = vmatprep.subr.bf16.mxu0 0
    %1455 = vmatpush1.bf16.msra.mxu0 0
    %1456 = vmatprep.subr.bf16.mxu0 0
    %1457 = vmatpush1.bf16.msra.mxu0 0
    %1458 = vmatprep.subr.bf16.mxu0 0
    %1459 = vmatpush1.bf16.msra.mxu0 0
    %1460 = vmatprep.subr.bf16.mxu0 0
    %1461 = vmatpush1.bf16.msra.mxu0 0
    %1462 = vmatprep.subr.bf16.mxu0 0
    %1463 = vmatpush1.bf16.msra.mxu0 0
    %1464 = vmatprep.subr.bf16.mxu0 0
    %1465 = vmatpush1.bf16.msra.mxu0 0
    %1466 = vmatprep.mubr.bf16.mxu0 0
    %1467 = vmatmul.mubr.bf16.gmra.mrb[0].mxu0 %v1432
    %v1468 = vpop.f32.mrb[0].mxu0
    %v1469 = vadd.f32 %v660, %v1468
    %v1470 = vpop.f32.mrb[0].mxu0
    %v1471 = vpop.f32.mrb[0].mxu0
    %v1472 = vadd.f32 %v660, %v1471
    %v1473 = vpop.f32.mrb[0].mxu0
    %1474 = vdwg.mxu0
    %v1475 = vmul.f32 %v1469, %v517
    %v1476 = vmul.f32 %v1472, %v518
    %v1477 = vadd.f32 %v1475, %v490
    %v1478 = vadd.f32 %v1476, %v496
    %v1479 = vtanh.pop %v1477
    %v1480 = vtanh.pop %v1478
    %v1481 = vmul.f32 %v1479, %v1479
    %v1482 = vmul.f32 %v1480, %v1480
    %v1483 = vsub.f32 1.0, %v1481
    %v1484 = vsub.f32 1.0, %v1482
    %v1485 = vmul.f32 %v517, %v1483
    %v1486 = vmul.f32 %v518, %v1484
    %v1487 = vpack.c.bf16 %v1423, %v1422
    %v1488 = vpack.c.bf16 %v1425, %v1424
    %v1489 = vpack.c.bf16 %v1427, %v1426
    %v1490 = vpack.c.bf16 %v1429, %v1428
    %v1492 = vsel %vm662, %v1487, 0
    %v1495 = vsel %vm662, %v1488, 0
    %v1498 = vsel %vm662, %v1489, 0
    %v1501 = vsel %vm662, %v1490, 0
    %1503 = vmatprep.subr.bf16.mxu0 0
    %1504 = vmatpush1.bf16.msra.mxu0 %v355
    %1505 = vmatprep.subr.bf16.mxu0 0
    %1506 = vmatpush1.bf16.msra.mxu0 %v356
    %1507 = vmatprep.subr.bf16.mxu0 0
    %1508 = vmatpush1.bf16.msra.mxu0 0
    %1509 = vmatprep.subr.bf16.mxu0 0
    %1510 = vmatpush1.bf16.msra.mxu0 0
    %1511 = vmatprep.subr.bf16.mxu0 0
    %1512 = vmatpush1.bf16.msra.mxu0 0
    %1513 = vmatprep.subr.bf16.mxu0 0
    %1514 = vmatpush1.bf16.msra.mxu0 0
    %1515 = vmatprep.subr.bf16.mxu0 0
    %1516 = vmatpush1.bf16.msra.mxu0 0
    %1517 = vmatprep.subr.bf16.mxu0 0
    %1518 = vmatpush1.bf16.msra.mxu0 0
    %1519 = vmatprep.subr.bf16.mxu0 0
    %1520 = vmatpush1.bf16.msra.mxu0 0
    %1521 = vmatprep.subr.bf16.mxu0 0
    %1522 = vmatpush1.bf16.msra.mxu0 0
    %1523 = vmatprep.subr.bf16.mxu0 0
    %1524 = vmatpush1.bf16.msra.mxu0 0
    %1525 = vmatprep.subr.bf16.mxu0 0
    %1526 = vmatpush1.bf16.msra.mxu0 0
    %1527 = vmatprep.subr.bf16.mxu0 0
    %1528 = vmatpush1.bf16.msra.mxu0 0
    %1529 = vmatprep.subr.bf16.mxu0 0
    %1530 = vmatpush1.bf16.msra.mxu0 0
    %1531 = vmatprep.subr.bf16.mxu0 0
    %1532 = vmatpush1.bf16.msra.mxu0 0
    %1533 = vmatprep.subr.bf16.mxu0 0
    %1534 = vmatpush1.bf16.msra.mxu0 0
    %1535 = vmatprep.mubr.bf16.mxu0 0
    %1536 = vmatmul.mubr.bf16.gmra.mrb[0].mxu0 %v1492
    %v1537 = vpop.f32.mrb[0].mxu0
    %v1538 = vadd.f32 0.0, %v1537
    %v1539 = vpop.f32.mrb[0].mxu0
    %v1540 = vpop.f32.mrb[0].mxu0
    %v1541 = vadd.f32 0.0, %v1540
    %v1542 = vpop.f32.mrb[0].mxu0
    %1543 = vmatprep.mubr.bf16.mxu0 0
    %1544 = vmatmul.mubr.bf16.gmra.mrb[0].mxu0 %v1495
    %v1545 = vpop.f32.mrb[0].mxu0
    %v1546 = vadd.f32 0.0, %v1545
    %v1547 = vpop.f32.mrb[0].mxu0
    %v1548 = vpop.f32.mrb[0].mxu0
    %v1549 = vadd.f32 0.0, %v1548
    %v1550 = vpop.f32.mrb[0].mxu0
    %1551 = vmatprep.mubr.bf16.mxu0 0
    %1552 = vmatmul.mubr.bf16.gmra.mrb[0].mxu0 %v1498
    %v1553 = vpop.f32.mrb[0].mxu0
    %v1554 = vadd.f32 0.0, %v1553
    %v1555 = vpop.f32.mrb[0].mxu0
    %v1556 = vpop.f32.mrb[0].mxu0
    %v1557 = vadd.f32 0.0, %v1556
    %v1558 = vpop.f32.mrb[0].mxu0
    %1559 = vmatprep.mubr.bf16.mxu0 0
    %1560 = vmatmul.mubr.bf16.gmra.mrb[0].mxu0 %v1501
    %v1561 = vpop.f32.mrb[0].mxu0
    %v1562 = vadd.f32 0.0, %v1561
    %v1563 = vpop.f32.mrb[0].mxu0
    %v1564 = vpop.f32.mrb[0].mxu0
    %v1565 = vadd.f32 0.0, %v1564
    %v1566 = vpop.f32.mrb[0].mxu0
    %1567 = vdwg.mxu0
    %v1568 = vmul.f32 %v1538, %v1485
    %v1569 = vmul.f32 %v1541, %v1486
    %v1570 = vmul.f32 %v1546, %v1485
    %v1571 = vmul.f32 %v1549, %v1486
    %v1572 = vmul.f32 %v1554, %v1485
    %v1573 = vmul.f32 %v1557, %v1486
    %v1574 = vmul.f32 %v1562, %v1485
    %v1575 = vmul.f32 %v1565, %v1486
    %v1576 = vpack.c.bf16 %v1480, %v1479
    %v1578 = vsel %vm662, %v1576, 0
    %1580 = vmatprep.subr.bf16.mxu0 0
    %1581 = vmatpush1.bf16.msra.mxu0 %v357
    %1582 = vmatprep.subr.bf16.mxu0 0
    %1583 = vmatpush1.bf16.msra.mxu0 %v358
    %1584 = vmatprep.subr.bf16.mxu0 0
    %1585 = vmatpush1.bf16.msra.mxu0 0
    %1586 = vmatprep.subr.bf16.mxu0 0
    %1587 = vmatpush1.bf16.msra.mxu0 0
    %1588 = vmatprep.subr.bf16.mxu0 0
    %1589 = vmatpush1.bf16.msra.mxu0 0
    %1590 = vmatprep.subr.bf16.mxu0 0
    %1591 = vmatpush1.bf16.msra.mxu0 0
    %1592 = vmatprep.subr.bf16.mxu0 0
    %1593 = vmatpush1.bf16.msra.mxu0 0
    %1594 = vmatprep.subr.bf16.mxu0 0
    %1595 = vmatpush1.bf16.msra.mxu0 0
    %1596 = vmatprep.subr.bf16.mxu0 0
    %1597 = vmatpush1.bf16.msra.mxu0 0
    %1598 = vmatprep.subr.bf16.mxu0 0
    %1599 = vmatpush1.bf16.msra.mxu0 0
    %1600 = vmatprep.subr.bf16.mxu0 0
    %1601 = vmatpush1.bf16.msra.mxu0 0
    %1602 = vmatprep.subr.bf16.mxu0 0
    %1603 = vmatpush1.bf16.msra.mxu0 0
    %1604 = vmatprep.subr.bf16.mxu0 0
    %1605 = vmatpush1.bf16.msra.mxu0 0
    %1606 = vmatprep.subr.bf16.mxu0 0
    %1607 = vmatpush1.bf16.msra.mxu0 0
    %1608 = vmatprep.subr.bf16.mxu0 0
    %1609 = vmatpush1.bf16.msra.mxu0 0
    %1610 = vmatprep.subr.bf16.mxu0 0
    %1611 = vmatpush1.bf16.msra.mxu0 0
    %1612 = vmatprep.mubr.bf16.mxu0 0
    %1613 = vmatmul.mubr.bf16.gmra.mrb[0].mxu0 %v1578
    %v1614 = vpop.f32.mrb[0].mxu0
    %v1615 = vadd.f32 %v813, %v1614
    %v1616 = vpop.f32.mrb[0].mxu0
    %v1617 = vpop.f32.mrb[0].mxu0
    %v1618 = vadd.f32 %v813, %v1617
    %v1619 = vpop.f32.mrb[0].mxu0
    %1620 = vdwg.mxu0
    %v1621 = vmul.f32 %v1615, %v527
    %v1622 = vmul.f32 %v1618, %v528
    %v1623 = vadd.f32 %v1621, %v492
    %v1624 = vadd.f32 %v1622, %v498
    %v1625 = vpack.c.bf16 %v1569, %v1568
    %v1626 = vpack.c.bf16 %v1571, %v1570
    %v1627 = vpack.c.bf16 %v1573, %v1572
    %v1628 = vpack.c.bf16 %v1575, %v1574
    %v1630 = vsel %vm662, %v1625, 0
    %v1633 = vsel %vm662, %v1626, 0
    %v1636 = vsel %vm662, %v1627, 0
    %v1639 = vsel %vm662, %v1628, 0
    %1641 = vmatprep.subr.bf16.mxu0 0
    %1642 = vmatpush1.bf16.msra.mxu0 %v357
    %1643 = vmatprep.subr.bf16.mxu0 0
    %1644 = vmatpush1.bf16.msra.mxu0 %v358
    %1645 = vmatprep.subr.bf16.mxu0 0
    %1646 = vmatpush1.bf16.msra.mxu0 0
    %1647 = vmatprep.subr.bf16.mxu0 0
    %1648 = vmatpush1.bf16.msra.mxu0 0
    %1649 = vmatprep.subr.bf16.mxu0 0
    %1650 = vmatpush1.bf16.msra.mxu0 0
    %1651 = vmatprep.subr.bf16.mxu0 0
    %1652 = vmatpush1.bf16.msra.mxu0 0
    %1653 = vmatprep.subr.bf16.mxu0 0
    %1654 = vmatpush1.bf16.msra.mxu0 0
    %1655 = vmatprep.subr.bf16.mxu0 0
    %1656 = vmatpush1.bf16.msra.mxu0 0
    %1657 = vmatprep.subr.bf16.mxu0 0
    %1658 = vmatpush1.bf16.msra.mxu0 0
    %1659 = vmatprep.subr.bf16.mxu0 0
    %1660 = vmatpush1.bf16.msra.mxu0 0
    %1661 = vmatprep.subr.bf16.mxu0 0
    %1662 = vmatpush1.bf16.msra.mxu0 0
    %1663 = vmatprep.subr.bf16.mxu0 0
    %1664 = vmatpush1.bf16.msra.mxu0 0
    %1665 = vmatprep.subr.bf16.mxu0 0
    %1666 = vmatpush1.bf16.msra.mxu0 0
    %1667 = vmatprep.subr.bf16.mxu0 0
    %1668 = vmatpush1.bf16.msra.mxu0 0
    %1669 = vmatprep.subr.bf16.mxu0 0
    %1670 = vmatpush1.bf16.msra.mxu0 0
    %1671 = vmatprep.subr.bf16.mxu0 0
    %1672 = vmatpush1.bf16.msra.mxu0 0
    %1673 = vmatprep.mubr.bf16.mxu0 0
    %1674 = vmatmul.mubr.bf16.gmra.mrb[0].mxu0 %v1630
    %v1675 = vpop.f32.mrb[0].mxu0
    %v1676 = vadd.f32 0.0, %v1675
    %v1677 = vpop.f32.mrb[0].mxu0
    %v1678 = vpop.f32.mrb[0].mxu0
    %v1679 = vadd.f32 0.0, %v1678
    %v1680 = vpop.f32.mrb[0].mxu0
    %1681 = vmatprep.mubr.bf16.mxu0 0
    %1682 = vmatmul.mubr.bf16.gmra.mrb[0].mxu0 %v1633
    %v1683 = vpop.f32.mrb[0].mxu0
    %v1684 = vadd.f32 0.0, %v1683
    %v1685 = vpop.f32.mrb[0].mxu0
    %v1686 = vpop.f32.mrb[0].mxu0
    %v1687 = vadd.f32 0.0, %v1686
    %v1688 = vpop.f32.mrb[0].mxu0
    %1689 = vmatprep.mubr.bf16.mxu0 0
    %1690 = vmatmul.mubr.bf16.gmra.mrb[0].mxu0 %v1636
    %v1691 = vpop.f32.mrb[0].mxu0
    %v1692 = vadd.f32 0.0, %v1691
    %v1693 = vpop.f32.mrb[0].mxu0
    %v1694 = vpop.f32.mrb[0].mxu0
    %v1695 = vadd.f32 0.0, %v1694
    %v1696 = vpop.f32.mrb[0].mxu0
    %1697 = vmatprep.mubr.bf16.mxu0 0
    %1698 = vmatmul.mubr.bf16.gmra.mrb[0].mxu0 %v1639
    %v1699 = vpop.f32.mrb[0].mxu0
    %v1700 = vadd.f32 0.0, %v1699
    %v1701 = vpop.f32.mrb[0].mxu0
    %v1702 = vpop.f32.mrb[0].mxu0
    %v1703 = vadd.f32 0.0, %v1702
    %v1704 = vpop.f32.mrb[0].mxu0
    %1705 = vdwg.mxu0
    %v1706 = vmul.f32 %v1676, %v527
    %v1707 = vmul.f32 %v1679, %v528
    %v1708 = vmul.f32 %v1684, %v527
    %v1709 = vmul.f32 %v1687, %v528
    %v1710 = vmul.f32 %v1692, %v527
    %v1711 = vmul.f32 %v1695, %v528
    %v1712 = vmul.f32 %v1700, %v527
    %v1713 = vmul.f32 %v1703, %v528
    %v1714 = vmul.f32 %v1706, %v414
    %v1715 = vmul.f32 %v1707, %v414
    %v1716 = vmul.f32 %v1708, %v415
    %v1717 = vmul.f32 %v1709, %v415
    %v1718 = vmul.f32 %v1710, %v416
    %v1719 = vmul.f32 %v1711, %v416
    %v1720 = vmul.f32 %v1712, %v417
    %v1721 = vmul.f32 %v1713, %v417
    %v1722 = vsel %vm586, %v1714, 0.0
    %v1723 = vsel %vm586, %v1716, 0.0
    %v1724 = vadd.f32 %v1722, %v1723
    %v1725 = vsel %vm586, %v1718, 0.0
    %v1726 = vadd.f32 %v1724, %v1725
    %v1727 = vsel %vm586, %v1720, 0.0
    %v1728 = vadd.f32 %v1726, %v1727
    %v1729 = vsel %vm586, %v1715, 0.0
    %v1730 = vsel %vm586, %v1717, 0.0
    %v1731 = vadd.f32 %v1729, %v1730
    %v1732 = vsel %vm586, %v1719, 0.0
    %v1733 = vadd.f32 %v1731, %v1732
    %v1734 = vsel %vm586, %v1721, 0.0
    %v1735 = vadd.f32 %v1733, %v1734
    %v1736 = vsel %vm586, %v1728, 0.0
    %1737 = vadd.xlane.f32.xlu0 %v1736
    %v1738 = vpop.xlane.xlu0 %1737
    %v1739 = vsel %vm586, %v1735, 0.0
    %1740 = vadd.xlane.f32.xlu0 %v1739
    %v1741 = vpop.xlane.xlu0 %1740
    %v1742 = vmul.f32 %v1623, 0.125
    %v1743 = vmul.f32 %v1624, 0.125
    %v1744 = vadd.f32 %v424, %v1742
    %v1745 = vadd.f32 %v425, %v1743
    %v1746 = vpack.c.bf16 %v1745, %v1744
    %v1748 = vsel %vm586, %v1746, 0
    %1750 = vmatprep.subr.bf16.mxu0 0
    %1751 = vmatpush1.bf16.msra.mxu0 %v592
    %1752 = vmatprep.subr.bf16.mxu0 0
    %1753 = vmatpush1.bf16.msra.mxu0 0
    %1754 = vmatprep.subr.bf16.mxu0 0
    %1755 = vmatpush1.bf16.msra.mxu0 0
    %1756 = vmatprep.subr.bf16.mxu0 0
    %1757 = vmatpush1.bf16.msra.mxu0 0
    %1758 = vmatprep.subr.bf16.mxu0 0
    %1759 = vmatpush1.bf16.msra.mxu0 0
    %1760 = vmatprep.subr.bf16.mxu0 0
    %1761 = vmatpush1.bf16.msra.mxu0 0
    %1762 = vmatprep.subr.bf16.mxu0 0
    %1763 = vmatpush1.bf16.msra.mxu0 0
    %1764 = vmatprep.subr.bf16.mxu0 0
    %1765 = vmatpush1.bf16.msra.mxu0 0
    %1766 = vmatprep.subr.bf16.mxu0 0
    %1767 = vmatpush1.bf16.msra.mxu0 0
    %1768 = vmatprep.subr.bf16.mxu0 0
    %1769 = vmatpush1.bf16.msra.mxu0 0
    %1770 = vmatprep.subr.bf16.mxu0 0
    %1771 = vmatpush1.bf16.msra.mxu0 0
    %1772 = vmatprep.subr.bf16.mxu0 0
    %1773 = vmatpush1.bf16.msra.mxu0 0
    %1774 = vmatprep.subr.bf16.mxu0 0
    %1775 = vmatpush1.bf16.msra.mxu0 0
    %1776 = vmatprep.subr.bf16.mxu0 0
    %1777 = vmatpush1.bf16.msra.mxu0 0
    %1778 = vmatprep.subr.bf16.mxu0 0
    %1779 = vmatpush1.bf16.msra.mxu0 0
    %1780 = vmatprep.subr.bf16.mxu0 0
    %1781 = vmatpush1.bf16.msra.mxu0 0
    %1782 = vmatprep.mubr.bf16.mxu0 0
    %1783 = vmatmul.mubr.bf16.gmra.mrb[0].mxu0 %v1748
    %v1784 = vpop.f32.mrb[0].mxu0
    %v1785 = vadd.f32 %v584, %v1784
    %v1786 = vpop.f32.mrb[0].mxu0
    %v1787 = vpop.f32.mrb[0].mxu0
    %v1788 = vadd.f32 %v584, %v1787
    %v1789 = vpop.f32.mrb[0].mxu0
    %1790 = vdwg.mxu0
    %v1791 = vmul.f32 %v1785, %v557
    %v1792 = vmul.f32 %v1788, %v558
    %v1793 = vadd.f32 %v1791, %v538
    %v1794 = vadd.f32 %v1792, %v544
    %v1795 = vtanh.pop %v1793
    %v1796 = vtanh.pop %v1794
    %v1797 = vmul.f32 %v1795, %v1795
    %v1798 = vmul.f32 %v1796, %v1796
    %v1799 = vsub.f32 1.0, %v1797
    %v1800 = vsub.f32 1.0, %v1798
    %v1801 = vmul.f32 %v557, %v1799
    %v1802 = vmul.f32 %v558, %v1800
    %v1803 = vmul.f32 %v387, %v1801
    %v1804 = vmul.f32 %v387, %v1802
    %v1805 = vmul.f32 %v391, %v1801
    %v1806 = vmul.f32 %v391, %v1802
    %v1807 = vmul.f32 %v395, %v1801
    %v1808 = vmul.f32 %v395, %v1802
    %v1809 = vmul.f32 %v399, %v1801
    %v1810 = vmul.f32 %v399, %v1802
    %v1811 = vpack.c.bf16 %v1796, %v1795
    %v1813 = vsel %vm662, %v1811, 0
    %1815 = vmatprep.subr.bf16.mxu0 0
    %1816 = vmatpush1.bf16.msra.mxu0 %v355
    %1817 = vmatprep.subr.bf16.mxu0 0
    %1818 = vmatpush1.bf16.msra.mxu0 %v356
    %1819 = vmatprep.subr.bf16.mxu0 0
    %1820 = vmatpush1.bf16.msra.mxu0 0
    %1821 = vmatprep.subr.bf16.mxu0 0
    %1822 = vmatpush1.bf16.msra.mxu0 0
    %1823 = vmatprep.subr.bf16.mxu0 0
    %1824 = vmatpush1.bf16.msra.mxu0 0
    %1825 = vmatprep.subr.bf16.mxu0 0
    %1826 = vmatpush1.bf16.msra.mxu0 0
    %1827 = vmatprep.subr.bf16.mxu0 0
    %1828 = vmatpush1.bf16.msra.mxu0 0
    %1829 = vmatprep.subr.bf16.mxu0 0
    %1830 = vmatpush1.bf16.msra.mxu0 0
    %1831 = vmatprep.subr.bf16.mxu0 0
    %1832 = vmatpush1.bf16.msra.mxu0 0
    %1833 = vmatprep.subr.bf16.mxu0 0
    %1834 = vmatpush1.bf16.msra.mxu0 0
    %1835 = vmatprep.subr.bf16.mxu0 0
    %1836 = vmatpush1.bf16.msra.mxu0 0
    %1837 = vmatprep.subr.bf16.mxu0 0
    %1838 = vmatpush1.bf16.msra.mxu0 0
    %1839 = vmatprep.subr.bf16.mxu0 0
    %1840 = vmatpush1.bf16.msra.mxu0 0
    %1841 = vmatprep.subr.bf16.mxu0 0
    %1842 = vmatpush1.bf16.msra.mxu0 0
    %1843 = vmatprep.subr.bf16.mxu0 0
    %1844 = vmatpush1.bf16.msra.mxu0 0
    %1845 = vmatprep.subr.bf16.mxu0 0
    %1846 = vmatpush1.bf16.msra.mxu0 0
    %1847 = vmatprep.mubr.bf16.mxu0 0
    %1848 = vmatmul.mubr.bf16.gmra.mrb[0].mxu0 %v1813
    %v1849 = vpop.f32.mrb[0].mxu0
    %v1850 = vadd.f32 %v660, %v1849
    %v1851 = vpop.f32.mrb[0].mxu0
    %v1852 = vpop.f32.mrb[0].mxu0
    %v1853 = vadd.f32 %v660, %v1852
    %v1854 = vpop.f32.mrb[0].mxu0
    %1855 = vdwg.mxu0
    %v1856 = vmul.f32 %v1850, %v567
    %v1857 = vmul.f32 %v1853, %v568
    %v1858 = vadd.f32 %v1856, %v540
    %v1859 = vadd.f32 %v1857, %v546
    %v1860 = vtanh.pop %v1858
    %v1861 = vtanh.pop %v1859
    %v1862 = vmul.f32 %v1860, %v1860
    %v1863 = vmul.f32 %v1861, %v1861
    %v1864 = vsub.f32 1.0, %v1862
    %v1865 = vsub.f32 1.0, %v1863
    %v1866 = vmul.f32 %v567, %v1864
    %v1867 = vmul.f32 %v568, %v1865
    %v1868 = vpack.c.bf16 %v1804, %v1803
    %v1869 = vpack.c.bf16 %v1806, %v1805
    %v1870 = vpack.c.bf16 %v1808, %v1807
    %v1871 = vpack.c.bf16 %v1810, %v1809
    %v1873 = vsel %vm662, %v1868, 0
    %v1876 = vsel %vm662, %v1869, 0
    %v1879 = vsel %vm662, %v1870, 0
    %v1882 = vsel %vm662, %v1871, 0
    %1884 = vmatprep.subr.bf16.mxu0 0
    %1885 = vmatpush1.bf16.msra.mxu0 %v355
    %1886 = vmatprep.subr.bf16.mxu0 0
    %1887 = vmatpush1.bf16.msra.mxu0 %v356
    %1888 = vmatprep.subr.bf16.mxu0 0
    %1889 = vmatpush1.bf16.msra.mxu0 0
    %1890 = vmatprep.subr.bf16.mxu0 0
    %1891 = vmatpush1.bf16.msra.mxu0 0
    %1892 = vmatprep.subr.bf16.mxu0 0
    %1893 = vmatpush1.bf16.msra.mxu0 0
    %1894 = vmatprep.subr.bf16.mxu0 0
    %1895 = vmatpush1.bf16.msra.mxu0 0
    %1896 = vmatprep.subr.bf16.mxu0 0
    %1897 = vmatpush1.bf16.msra.mxu0 0
    %1898 = vmatprep.subr.bf16.mxu0 0
    %1899 = vmatpush1.bf16.msra.mxu0 0
    %1900 = vmatprep.subr.bf16.mxu0 0
    %1901 = vmatpush1.bf16.msra.mxu0 0
    %1902 = vmatprep.subr.bf16.mxu0 0
    %1903 = vmatpush1.bf16.msra.mxu0 0
    %1904 = vmatprep.subr.bf16.mxu0 0
    %1905 = vmatpush1.bf16.msra.mxu0 0
    %1906 = vmatprep.subr.bf16.mxu0 0
    %1907 = vmatpush1.bf16.msra.mxu0 0
    %1908 = vmatprep.subr.bf16.mxu0 0
    %1909 = vmatpush1.bf16.msra.mxu0 0
    %1910 = vmatprep.subr.bf16.mxu0 0
    %1911 = vmatpush1.bf16.msra.mxu0 0
    %1912 = vmatprep.subr.bf16.mxu0 0
    %1913 = vmatpush1.bf16.msra.mxu0 0
    %1914 = vmatprep.subr.bf16.mxu0 0
    %1915 = vmatpush1.bf16.msra.mxu0 0
    %1916 = vmatprep.mubr.bf16.mxu0 0
    %1917 = vmatmul.mubr.bf16.gmra.mrb[0].mxu0 %v1873
    %v1918 = vpop.f32.mrb[0].mxu0
    %v1919 = vadd.f32 0.0, %v1918
    %v1920 = vpop.f32.mrb[0].mxu0
    %v1921 = vpop.f32.mrb[0].mxu0
    %v1922 = vadd.f32 0.0, %v1921
    %v1923 = vpop.f32.mrb[0].mxu0
    %1924 = vmatprep.mubr.bf16.mxu0 0
    %1925 = vmatmul.mubr.bf16.gmra.mrb[0].mxu0 %v1876
    %v1926 = vpop.f32.mrb[0].mxu0
    %v1927 = vadd.f32 0.0, %v1926
    %v1928 = vpop.f32.mrb[0].mxu0
    %v1929 = vpop.f32.mrb[0].mxu0
    %v1930 = vadd.f32 0.0, %v1929
    %v1931 = vpop.f32.mrb[0].mxu0
    %1932 = vmatprep.mubr.bf16.mxu0 0
    %1933 = vmatmul.mubr.bf16.gmra.mrb[0].mxu0 %v1879
    %v1934 = vpop.f32.mrb[0].mxu0
    %v1935 = vadd.f32 0.0, %v1934
    %v1936 = vpop.f32.mrb[0].mxu0
    %v1937 = vpop.f32.mrb[0].mxu0
    %v1938 = vadd.f32 0.0, %v1937
    %v1939 = vpop.f32.mrb[0].mxu0
    %1940 = vmatprep.mubr.bf16.mxu0 0
    %1941 = vmatmul.mubr.bf16.gmra.mrb[0].mxu0 %v1882
    %v1942 = vpop.f32.mrb[0].mxu0
    %v1943 = vadd.f32 0.0, %v1942
    %v1944 = vpop.f32.mrb[0].mxu0
    %v1945 = vpop.f32.mrb[0].mxu0
    %v1946 = vadd.f32 0.0, %v1945
    %v1947 = vpop.f32.mrb[0].mxu0
    %1948 = vdwg.mxu0
    %v1949 = vmul.f32 %v1919, %v1866
    %v1950 = vmul.f32 %v1922, %v1867
    %v1951 = vmul.f32 %v1927, %v1866
    %v1952 = vmul.f32 %v1930, %v1867
    %v1953 = vmul.f32 %v1935, %v1866
    %v1954 = vmul.f32 %v1938, %v1867
    %v1955 = vmul.f32 %v1943, %v1866
    %v1956 = vmul.f32 %v1946, %v1867
    %v1957 = vpack.c.bf16 %v1861, %v1860
    %v1959 = vsel %vm662, %v1957, 0
    %1961 = vmatprep.subr.bf16.mxu0 0
    %1962 = vmatpush1.bf16.msra.mxu0 %v357
    %1963 = vmatprep.subr.bf16.mxu0 0
    %1964 = vmatpush1.bf16.msra.mxu0 %v358
    %1965 = vmatprep.subr.bf16.mxu0 0
    %1966 = vmatpush1.bf16.msra.mxu0 0
    %1967 = vmatprep.subr.bf16.mxu0 0
    %1968 = vmatpush1.bf16.msra.mxu0 0
    %1969 = vmatprep.subr.bf16.mxu0 0
    %1970 = vmatpush1.bf16.msra.mxu0 0
    %1971 = vmatprep.subr.bf16.mxu0 0
    %1972 = vmatpush1.bf16.msra.mxu0 0
    %1973 = vmatprep.subr.bf16.mxu0 0
    %1974 = vmatpush1.bf16.msra.mxu0 0
    %1975 = vmatprep.subr.bf16.mxu0 0
    %1976 = vmatpush1.bf16.msra.mxu0 0
    %1977 = vmatprep.subr.bf16.mxu0 0
    %1978 = vmatpush1.bf16.msra.mxu0 0
    %1979 = vmatprep.subr.bf16.mxu0 0
    %1980 = vmatpush1.bf16.msra.mxu0 0
    %1981 = vmatprep.subr.bf16.mxu0 0
    %1982 = vmatpush1.bf16.msra.mxu0 0
    %1983 = vmatprep.subr.bf16.mxu0 0
    %1984 = vmatpush1.bf16.msra.mxu0 0
    %1985 = vmatprep.subr.bf16.mxu0 0
    %1986 = vmatpush1.bf16.msra.mxu0 0
    %1987 = vmatprep.subr.bf16.mxu0 0
    %1988 = vmatpush1.bf16.msra.mxu0 0
    %1989 = vmatprep.subr.bf16.mxu0 0
    %1990 = vmatpush1.bf16.msra.mxu0 0
    %1991 = vmatprep.subr.bf16.mxu0 0
    %1992 = vmatpush1.bf16.msra.mxu0 0
    %1993 = vmatprep.mubr.bf16.mxu0 0
    %1994 = vmatmul.mubr.bf16.gmra.mrb[0].mxu0 %v1959
    %v1995 = vpop.f32.mrb[0].mxu0
    %v1996 = vadd.f32 %v813, %v1995
    %v1997 = vpop.f32.mrb[0].mxu0
    %v1998 = vpop.f32.mrb[0].mxu0
    %v1999 = vadd.f32 %v813, %v1998
    %v2000 = vpop.f32.mrb[0].mxu0
    %2001 = vdwg.mxu0
    %v2002 = vmul.f32 %v1996, %v577
    %v2003 = vmul.f32 %v1999, %v578
    %v2004 = vadd.f32 %v2002, %v542
    %v2005 = vadd.f32 %v2003, %v548
    %v2006 = vpack.c.bf16 %v1950, %v1949
    %v2007 = vpack.c.bf16 %v1952, %v1951
    %v2008 = vpack.c.bf16 %v1954, %v1953
    %v2009 = vpack.c.bf16 %v1956, %v1955
    %v2011 = vsel %vm662, %v2006, 0
    %v2014 = vsel %vm662, %v2007, 0
    %v2017 = vsel %vm662, %v2008, 0
    %v2020 = vsel %vm662, %v2009, 0
    %2022 = vmatprep.subr.bf16.mxu0 0
    %2023 = vmatpush1.bf16.msra.mxu0 %v357
    %2024 = vmatprep.subr.bf16.mxu0 0
    %2025 = vmatpush1.bf16.msra.mxu0 %v358
    %2026 = vmatprep.subr.bf16.mxu0 0
    %2027 = vmatpush1.bf16.msra.mxu0 0
    %2028 = vmatprep.subr.bf16.mxu0 0
    %2029 = vmatpush1.bf16.msra.mxu0 0
    %2030 = vmatprep.subr.bf16.mxu0 0
    %2031 = vmatpush1.bf16.msra.mxu0 0
    %2032 = vmatprep.subr.bf16.mxu0 0
    %2033 = vmatpush1.bf16.msra.mxu0 0
    %2034 = vmatprep.subr.bf16.mxu0 0
    %2035 = vmatpush1.bf16.msra.mxu0 0
    %2036 = vmatprep.subr.bf16.mxu0 0
    %2037 = vmatpush1.bf16.msra.mxu0 0
    %2038 = vmatprep.subr.bf16.mxu0 0
    %2039 = vmatpush1.bf16.msra.mxu0 0
    %2040 = vmatprep.subr.bf16.mxu0 0
    %2041 = vmatpush1.bf16.msra.mxu0 0
    %2042 = vmatprep.subr.bf16.mxu0 0
    %2043 = vmatpush1.bf16.msra.mxu0 0
    %2044 = vmatprep.subr.bf16.mxu0 0
    %2045 = vmatpush1.bf16.msra.mxu0 0
    %2046 = vmatprep.subr.bf16.mxu0 0
    %2047 = vmatpush1.bf16.msra.mxu0 0
    %2048 = vmatprep.subr.bf16.mxu0 0
    %2049 = vmatpush1.bf16.msra.mxu0 0
    %2050 = vmatprep.subr.bf16.mxu0 0
    %2051 = vmatpush1.bf16.msra.mxu0 0
    %2052 = vmatprep.subr.bf16.mxu0 0
    %2053 = vmatpush1.bf16.msra.mxu0 0
    %2054 = vmatprep.mubr.bf16.mxu0 0
    %2055 = vmatmul.mubr.bf16.gmra.mrb[0].mxu0 %v2011
    %v2056 = vpop.f32.mrb[0].mxu0
    %v2057 = vadd.f32 0.0, %v2056
    %v2058 = vpop.f32.mrb[0].mxu0
    %v2059 = vpop.f32.mrb[0].mxu0
    %v2060 = vadd.f32 0.0, %v2059
    %v2061 = vpop.f32.mrb[0].mxu0
    %2062 = vmatprep.mubr.bf16.mxu0 0
    %2063 = vmatmul.mubr.bf16.gmra.mrb[0].mxu0 %v2014
    %v2064 = vpop.f32.mrb[0].mxu0
    %v2065 = vadd.f32 0.0, %v2064
    %v2066 = vpop.f32.mrb[0].mxu0
    %v2067 = vpop.f32.mrb[0].mxu0
    %v2068 = vadd.f32 0.0, %v2067
    %v2069 = vpop.f32.mrb[0].mxu0
    %2070 = vmatprep.mubr.bf16.mxu0 0
    %2071 = vmatmul.mubr.bf16.gmra.mrb[0].mxu0 %v2017
    %v2072 = vpop.f32.mrb[0].mxu0
    %v2073 = vadd.f32 0.0, %v2072
    %v2074 = vpop.f32.mrb[0].mxu0
    %v2075 = vpop.f32.mrb[0].mxu0
    %v2076 = vadd.f32 0.0, %v2075
    %v2077 = vpop.f32.mrb[0].mxu0
    %2078 = vmatprep.mubr.bf16.mxu0 0
    %2079 = vmatmul.mubr.bf16.gmra.mrb[0].mxu0 %v2020
    %v2080 = vpop.f32.mrb[0].mxu0
    %v2081 = vadd.f32 0.0, %v2080
    %v2082 = vpop.f32.mrb[0].mxu0
    %v2083 = vpop.f32.mrb[0].mxu0
    %v2084 = vadd.f32 0.0, %v2083
    %v2085 = vpop.f32.mrb[0].mxu0
    %2086 = vdwg.mxu0
    %v2087 = vmul.f32 %v2057, %v577
    %v2088 = vmul.f32 %v2060, %v578
    %v2089 = vmul.f32 %v2065, %v577
    %v2090 = vmul.f32 %v2068, %v578
    %v2091 = vmul.f32 %v2073, %v577
    %v2092 = vmul.f32 %v2076, %v578
    %v2093 = vmul.f32 %v2081, %v577
    %v2094 = vmul.f32 %v2084, %v578
    %v2095 = vmul.f32 %v2087, %v414
    %v2096 = vmul.f32 %v2088, %v414
    %v2097 = vmul.f32 %v2089, %v415
    %v2098 = vmul.f32 %v2090, %v415
    %v2099 = vmul.f32 %v2091, %v416
    %v2100 = vmul.f32 %v2092, %v416
    %v2101 = vmul.f32 %v2093, %v417
    %v2102 = vmul.f32 %v2094, %v417
    %v2103 = vsel %vm586, %v2095, 0.0
    %v2104 = vsel %vm586, %v2097, 0.0
    %v2105 = vadd.f32 %v2103, %v2104
    %v2106 = vsel %vm586, %v2099, 0.0
    %v2107 = vadd.f32 %v2105, %v2106
    %v2108 = vsel %vm586, %v2101, 0.0
    %v2109 = vadd.f32 %v2107, %v2108
    %v2110 = vsel %vm586, %v2096, 0.0
    %v2111 = vsel %vm586, %v2098, 0.0
    %v2112 = vadd.f32 %v2110, %v2111
    %v2113 = vsel %vm586, %v2100, 0.0
    %v2114 = vadd.f32 %v2112, %v2113
    %v2115 = vsel %vm586, %v2102, 0.0
    %v2116 = vadd.f32 %v2114, %v2115
    %v2117 = vsel %vm586, %v2109, 0.0
    %2118 = vadd.xlane.f32.xlu0 %v2117
    %v2119 = vpop.xlane.xlu0 %2118
    %v2120 = vsel %vm586, %v2116, 0.0
    %2121 = vadd.xlane.f32.xlu0 %v2120
    %v2122 = vpop.xlane.xlu0 %2121
    %v2123 = vmul.f32 %v1242, 2.0
    %v2124 = vmul.f32 %v1243, 2.0
    %v2125 = vadd.f32 %v861, %v2123
    %v2126 = vadd.f32 %v862, %v2124
    %v2127 = vmul.f32 %v1623, 2.0
    %v2128 = vmul.f32 %v1624, 2.0
    %v2129 = vadd.f32 %v2125, %v2127
    %v2130 = vadd.f32 %v2126, %v2128
    %v2131 = vadd.f32 %v2129, %v2004
    %v2132 = vadd.f32 %v2130, %v2005
    %v2133 = vmul.f32 %v2131, 0.020833334
    %v2134 = vmul.f32 %v2132, 0.020833334
    %v2135 = vadd.f32 %v424, %v2133
    %v2136 = vadd.f32 %v425, %v2134
    %v2137 = vmul.f32 %v1357, 2.0
    %v2138 = vmul.f32 %v1360, 2.0
    %v2139 = vadd.f32 %v976, %v2137
    %v2140 = vadd.f32 %v979, %v2138
    %v2141 = vmul.f32 %v1738, 2.0
    %v2142 = vmul.f32 %v1741, 2.0
    %v2143 = vadd.f32 %v2139, %v2141
    %v2144 = vadd.f32 %v2140, %v2142
    %v2145 = vadd.f32 %v2143, %v2119
    %v2146 = vadd.f32 %v2144, %v2122
    %v2147 = vmul.f32 %v2145, 0.020833334
    %v2148 = vmul.f32 %v2146, 0.020833334
    %v2149 = vsub.f32 %v426, %v2147
    %v2150 = vsub.f32 %v427, %v2148
  $region46: #{tpu_custom_call.1} parent=0 // loop_footer
    %s423 = sadd.s32 1, %s419
  $region47: #{tpu_custom_call.1} parent=0 // loop_footer_branch
    %418 = sbr.rel target = $region43
  $region48: #{tpu_custom_call.1} parent=0 // loop_exit
    _
  %vm2151 = vcmask 31744
  %2152 = vst.msk [vmem:[%s10] sm:$0xff] %vm2151, %v424
  %2153 = vst.msk [vmem:[%s10 + $0x8] sm:$0xff] %vm2151, %v425
  %vm2154 = vcmask 7168
  %2155 = vst.msk [vmem:[%s11] sm:$0xff] %vm2154, %v426
  %2156 = vst.msk [vmem:[%s11 + $0x8] sm:$0xff] %vm2154, %v427
  // Predicated region
  $region49: #{tpu_custom_call.1} parent=0 // pred_check
    _
  $region50: #{tpu_custom_call.1} parent=0 // pred_check_branch
    %2158 = sbr.rel (0) target = $region52
  $region51: #{tpu_custom_call.1} parent=0 // pred_region
    _
  $region52: #{tpu_custom_call.1} parent=0 // pred_fallthru
    _
  // Predicated region
  $region53: #{tpu_custom_call.1} parent=0 // pred_check
    _
  $region54: #{tpu_custom_call.1} parent=0 // pred_check_branch
    %2160 = sbr.rel (0) target = $region56
  $region55: #{tpu_custom_call.1} parent=0 // pred_region
    _
  $region56: #{tpu_custom_call.1} parent=0 // pred_fallthru
    _
  // Predicated region
  $region57: #{tpu_custom_call.1} parent=0 // pred_check
    _
  $region58: #{tpu_custom_call.1} parent=0 // pred_check_branch
    %2162 = sbr.rel (0) target = $region60
  $region59: #{tpu_custom_call.1} parent=0 // pred_region
    _
  $region60: #{tpu_custom_call.1} parent=0 // pred_fallthru
    _
  // Predicated region
  $region61: #{tpu_custom_call.1} parent=0 // pred_check
    _
  $region62: #{tpu_custom_call.1} parent=0 // pred_check_branch
    %2164 = sbr.rel (0) target = $region64
  $region63: #{tpu_custom_call.1} parent=0 // pred_region
    _
  $region64: #{tpu_custom_call.1} parent=0 // pred_fallthru
    _

</llo_original>
